<compile_context>
chip_gen: v6e
topology: v6e:2x2x1
jax: 0.10.0
libtpu: 0.0.40
codegen_flags: <defaults>
</compile_context>

<pallas_src>
import functools

import jax
import jax.numpy as jnp
from jax.experimental import pallas as pl
from jax.experimental.pallas import tpu as pltpu


def _round_up(n, m):
    return (n + m - 1) // m * m


def _coupling_kernel(n_layers, matmul_dtype, x_ref, mask_ref, omm_ref, *refs):
    """refs = [s_w0, s_b0, ..., s_w{L-1}, s_b{L-1},
               t_w0, t_b0, ..., t_w{L-1}, t_b{L-1},
               u_ref, ldj_ref]"""
    n_tower = 2 * n_layers
    s_refs = refs[:n_tower]
    t_refs = refs[n_tower:2 * n_tower]
    u_ref = refs[2 * n_tower]
    ldj_ref = refs[2 * n_tower + 1]

    x = x_ref[...]                       # (TILE_B, D_pad) f32
    mask = mask_ref[...]                 # (1, D_pad) f32, padded lanes = 0
    omm = omm_ref[...]                   # (1, D_pad) f32 = 1 - mask, padded lanes = 0
    mx = x * mask
    mx_mm = mx.astype(matmul_dtype)      # MXU operands (bf16 by default), f32 accumulation

    def tower(p, act):
        h = jnp.dot(mx_mm, p[0][...], preferred_element_type=jnp.float32) + p[1][...]
        for i in range(1, n_layers):
            h = act(h)                                                  # f32 elementwise
            h = jnp.dot(h.astype(matmul_dtype), p[2 * i][...],
                        preferred_element_type=jnp.float32) + p[2 * i + 1][...]
        return h

    s = tower(s_refs, jnp.tanh)                        # s_net: Tanh activations
    t = tower(t_refs, lambda v: jnp.maximum(v, 0.0))   # t_net: ReLU activations

    exp_neg_s = jnp.exp(-s)                            # computed once, f32
    u_ref[...] = (mx + omm * (x - t) * exp_neg_s).astype(u_ref.dtype)
    ldj_ref[...] = (-omm * s).astype(ldj_ref.dtype)


def prepare_coupling_params(mask, s_weights, s_biases, t_weights, t_biases,
                            *, matmul_dtype=jnp.bfloat16):
    """One-time parameter padding / fusion / dtype prep (hoisted out of per-call path).

    mask: (D,); *_weights[i]: (in_i, out_i) pre-transposed vs nn.Linear; *_biases[i]: (out_i,).
    """
    D = int(mask.shape[0])
    n_layers = len(s_weights)
    assert n_layers >= 2 and len(t_weights) == n_layers
    H = int(s_weights[0].shape[1])

    D_pad = _round_up(D, 128)
    H_pad = _round_up(H, 128)
    f32 = jnp.float32

    mask_p = jnp.zeros((1, D_pad), f32).at[0, :D].set(mask.astype(f32))
    omm_p = jnp.zeros((1, D_pad), f32).at[0, :D].set((1.0 - mask).astype(f32))

    def pad_w(w, in_pad, out_pad):
        return jnp.zeros((in_pad, out_pad), matmul_dtype).at[
            :w.shape[0], :w.shape[1]].set(w.astype(matmul_dtype))

    def pad_b(b, out_pad):
        return jnp.zeros((1, out_pad), f32).at[0, :b.shape[0]].set(b.astype(f32))

    def layer_dims(i):
        in_pad = D_pad if i == 0 else H_pad
        out_pad = D_pad if i == n_layers - 1 else H_pad
        return in_pad, out_pad

    params = []
    for weights, biases in ((s_weights, s_biases), (t_weights, t_biases)):
        for i in range(n_layers):
            in_pad, out_pad = layer_dims(i)
            params.append(pad_w(weights[i], in_pad, out_pad))
            params.append(pad_b(biases[i], out_pad))

    param_bytes = sum(int(a.size) * a.dtype.itemsize for a in [mask_p, omm_p] + params)
    return dict(mask_p=mask_p, omm_p=omm_p, params=tuple(params),
                D=D, D_pad=D_pad, H=H, H_pad=H_pad, n_layers=n_layers,
                matmul_dtype=matmul_dtype, param_bytes=param_bytes)


def _choose_tile_and_vmem(B, D_pad, H_pad, param_bytes, tile_b):
    try:
        phys = int(pltpu.get_tpu_info().vmem_capacity_bytes)
    except Exception:
        phys = 64 * 1024 * 1024            # v7x per-TC worst case
    budget = int(phys * 0.70)

    def footprint(tb, const_bufs=2):       # conservative: assume const blocks double-buffered
        io = tb * D_pad * 4 * 2            # x tile, double-buffered
        io += 2 * tb * D_pad * 4 * 2       # u, ldj tiles, double-buffered
        act = tb * max(H_pad, D_pad) * 4 * 6   # intermediates / compiler headroom
        return param_bytes * const_bufs + io + act

    TILE_B = min(tile_b, _round_up(B, 8))
    while TILE_B > 8 and footprint(TILE_B) > budget:
        TILE_B = _round_up(TILE_B // 2, 8)
    # Prefer >= 2 grid blocks so the "parallel" batch axis can split across v7x's 2 TCs.
    if pl.cdiv(B, TILE_B) < 2 and TILE_B >= 16:
        TILE_B = _round_up(TILE_B // 2, 8)
    vmem_limit = max(min(int(footprint(TILE_B) * 1.25), phys), 16 * 1024 * 1024)
    return TILE_B, vmem_limit


def linear_masked_coupling_forward(x, prepared, *, tile_b=512):
    """Pallas implementation of LinearMaskedCoupling.forward(x, y=None).

    x: (B, D) float32; `prepared` comes from prepare_coupling_params().
    Returns (u, log_abs_det_jacobian), both (B, D).
    """
    B, D = x.shape
    assert D == prepared["D"]
    D_pad, H_pad = prepared["D_pad"], prepared["H_pad"]
    n_layers = prepared["n_layers"]
    params = prepared["params"]
    dtype = x.dtype

    TILE_B, vmem_limit = _choose_tile_and_vmem(B, D_pad, H_pad,
                                               prepared["param_bytes"], tile_b)
    B_pad = _round_up(B, TILE_B)
    num_blocks = B_pad // TILE_B

    # Pad input to a lane/sublane-dense shape only when needed (zeros keep results exact).
    aligned = (B_pad == B and D_pad == D)
    x_p = x if aligned else jnp.zeros((B_pad, D_pad), dtype).at[:B, :D].set(x)

    const_map = lambda g: (0, 0)           # resident across grid steps
    batch_map = lambda g: (g, 0)
    has_buffered = getattr(pl, "Buffered", None) is not None

    def build(single_buffer_consts):
        if single_buffer_consts:
            const_spec = lambda shape: pl.BlockSpec(shape, const_map,
                                                    pipeline_mode=pl.Buffered(1))
        else:
            const_spec = lambda shape: pl.BlockSpec(shape, const_map)

        in_specs = [pl.BlockSpec((TILE_B, D_pad), batch_map),
                    const_spec((1, D_pad)), const_spec((1, D_pad))]
        in_specs += [const_spec(tuple(p.shape)) for p in params]
        out_specs = (pl.BlockSpec((TILE_B, D_pad), batch_map),
                     pl.BlockSpec((TILE_B, D_pad), batch_map))
        out_shape = (jax.ShapeDtypeStruct((B_pad, D_pad), dtype),
                     jax.ShapeDtypeStruct((B_pad, D_pad), dtype))

        flops_per_row = 0
        for i in range(n_layers):
            in_pad = D_pad if i == 0 else H_pad
            out_pad = D_pad if i == n_layers - 1 else H_pad
            flops_per_row += 2 * 2 * in_pad * out_pad              # both towers
        transc_per_row = (n_layers - 1) * H_pad + D_pad            # tanh tower + exp(-s)
        cost = pl.CostEstimate(
            flops=int(flops_per_row) * int(B_pad),
            transcendentals=int(transc_per_row) * int(B_pad),
            bytes_accessed=3 * int(B_pad) * int(D_pad) * 4 + int(prepared["param_bytes"]),
        )

        kernel = functools.partial(_coupling_kernel, n_layers, prepared["matmul_dtype"])
        return pl.pallas_call(
            kernel,
            out_shape=out_shape,
            grid=(num_blocks,),
            in_specs=in_specs,
            out_specs=out_specs,
            compiler_params=pltpu.CompilerParams(
                dimension_semantics=("parallel",),     # batch tiles across TCs (v7x)
                vmem_limit_bytes=int(vmem_limit)),
            cost_estimate=cost,
        )

    args = (x_p, prepared["mask_p"], prepared["omm_p"]) + tuple(params)
    if has_buffered:
        try:
            u_p, ldj_p = build(True)(*args)
        except Exception:
            # pipeline_mode=Buffered(1) not supported in this version -> default buffering.
            u_p, ldj_p = build(False)(*args)
    else:
        u_p, ldj_p = build(False)(*args)

    if aligned:
        return u_p, ldj_p
    return u_p[:B, :D], ldj_p[:B, :D]


def _reference_forward(x, mask, s_weights, s_biases, t_weights, t_biases):
    mx = x * mask[None, :]
    h = mx
    for i, (w, b) in enumerate(zip(s_weights, s_biases)):
        if i > 0:
            h = jnp.tanh(h)
        h = h @ w + b
    s = h
    h = mx
    for i, (w, b) in enumerate(zip(t_weights, t_biases)):
        if i > 0:
            h = jnp.maximum(h, 0.0)
        h = h @ w + b
    t = h
    u = mx + (1.0 - mask[None, :]) * (x - t) * jnp.exp(-s)
    ldj = -(1.0 - mask[None, :]) * s
    return u, ldj


if __name__ == "__main__":
    B, D, H, n_hidden = 8, 8, 32, 2     # batch, input_size, hidden_size, n_hidden
    n_layers = n_hidden + 2             # number of nn.Linear layers per tower

    key = jax.random.PRNGKey(0)
    k_x, k_p = jax.random.split(key)

    x = jax.random.normal(k_x, (B, D), dtype=jnp.float32)
    # Alternating binary mask, as typically used for RealNVP coupling layers.
    mask = (jnp.arange(D) % 2).astype(jnp.float32)

    # Deterministic parameter init mirroring nn.Linear default: U(-1/sqrt(fan_in), ...).
    dims = [D] + [H] * (n_hidden + 1) + [D]
    keys = jax.random.split(k_p, 2 * n_layers)
    s_weights, s_biases = [], []
    for i in range(n_layers):
        fan_in, fan_out = dims[i], dims[i + 1]
        bound = 1.0 / float(fan_in) ** 0.5
        s_weights.append(jax.random.uniform(keys[2 * i], (fan_in, fan_out),
                                            minval=-bound, maxval=bound, dtype=jnp.float32))
        s_biases.append(jax.random.uniform(keys[2 * i + 1], (fan_out,),
                                           minval=-bound, maxval=bound, dtype=jnp.float32))
    # t_net = copy.deepcopy(s_net) at init: identical Linear params, ReLU instead of Tanh.
    t_weights = list(s_weights)
    t_biases = list(s_biases)

    u_ref, ldj_ref = _reference_forward(x, mask, s_weights, s_biases, t_weights, t_biases)

    # Strict semantic validation: f32 matmul path.
    prep_f32 = prepare_coupling_params(mask, s_weights, s_biases, t_weights, t_biases,
                                       matmul_dtype=jnp.float32)
    u32, ldj32 = linear_masked_coupling_forward(x, prep_f32)
    jax.block_until_ready((u32, ldj32))
    assert u32.shape == (B, D) and ldj32.shape == (B, D)
    assert jnp.allclose(u32, u_ref, atol=1e-5, rtol=1e-5), "u mismatch (f32 path)"
    assert jnp.allclose(ldj32, ldj_ref, atol=1e-5, rtol=1e-5), "ldj mismatch (f32 path)"

    # Default fast path: bf16 MXU operands, f32 accumulation + f32 elementwise/tanh/exp.
    prep_bf16 = prepare_coupling_params(mask, s_weights, s_biases, t_weights, t_biases)
    u16, ldj16 = linear_masked_coupling_forward(x, prep_bf16)
    jax.block_until_ready((u16, ldj16))
    assert u16.shape == (B, D) and ldj16.shape == (B, D)
    assert jnp.allclose(u16, u_ref, atol=5e-2, rtol=5e-2), "u mismatch (bf16 path)"
    assert jnp.allclose(ldj16, ldj_ref, atol=5e-2, rtol=5e-2), "ldj mismatch (bf16 path)"
    assert bool(jnp.all(jnp.isfinite(u16))) and bool(jnp.all(jnp.isfinite(ldj16)))

    print("KERNEL_OK")
</pallas_src>

<mosaic_0001>
module attributes {stable_mosaic.version = 11 : i64} {
  func.func @_coupling_kernel(%arg0: i32, %arg1: memref<8x128xf32, #tpu.memory_space<vmem>>, %arg2: memref<1x128xf32, #tpu.memory_space<vmem>>, %arg3: memref<1x128xf32, #tpu.memory_space<vmem>>, %arg4: memref<128x128xf32, #tpu.memory_space<vmem>>, %arg5: memref<1x128xf32, #tpu.memory_space<vmem>>, %arg6: memref<128x128xf32, #tpu.memory_space<vmem>>, %arg7: memref<1x128xf32, #tpu.memory_space<vmem>>, %arg8: memref<128x128xf32, #tpu.memory_space<vmem>>, %arg9: memref<1x128xf32, #tpu.memory_space<vmem>>, %arg10: memref<128x128xf32, #tpu.memory_space<vmem>>, %arg11: memref<1x128xf32, #tpu.memory_space<vmem>>, %arg12: memref<128x128xf32, #tpu.memory_space<vmem>>, %arg13: memref<1x128xf32, #tpu.memory_space<vmem>>, %arg14: memref<128x128xf32, #tpu.memory_space<vmem>>, %arg15: memref<1x128xf32, #tpu.memory_space<vmem>>, %arg16: memref<128x128xf32, #tpu.memory_space<vmem>>, %arg17: memref<1x128xf32, #tpu.memory_space<vmem>>, %arg18: memref<128x128xf32, #tpu.memory_space<vmem>>, %arg19: memref<1x128xf32, #tpu.memory_space<vmem>>, %arg20: memref<8x128xf32, #tpu.memory_space<vmem>>, %arg21: memref<8x128xf32, #tpu.memory_space<vmem>>) attributes {dimension_semantics = [#tpu.dimension_semantics<parallel>], iteration_bounds = array<i64: 1>, scalar_prefetch = 0 : i64, scratch_operands = 0 : i64, tpu.core_type = #tpu.core_type<tc>, window_params = [{transform_indices = @transform_0, window_bounds = array<i64: 8, 128>}, {pipeline_mode = #tpu.pipeline_mode<synchronous>, transform_indices = @transform_1, window_bounds = array<i64: 1, 128>}, {pipeline_mode = #tpu.pipeline_mode<synchronous>, transform_indices = @transform_2, window_bounds = array<i64: 1, 128>}, {pipeline_mode = #tpu.pipeline_mode<synchronous>, transform_indices = @transform_3, window_bounds = array<i64: 128, 128>}, {pipeline_mode = #tpu.pipeline_mode<synchronous>, transform_indices = @transform_4, window_bounds = array<i64: 1, 128>}, {pipeline_mode = #tpu.pipeline_mode<synchronous>, transform_indices = @transform_5, window_bounds = array<i64: 128, 128>}, {pipeline_mode = #tpu.pipeline_mode<synchronous>, transform_indices = @transform_6, window_bounds = array<i64: 1, 128>}, {pipeline_mode = #tpu.pipeline_mode<synchronous>, transform_indices = @transform_7, window_bounds = array<i64: 128, 128>}, {pipeline_mode = #tpu.pipeline_mode<synchronous>, transform_indices = @transform_8, window_bounds = array<i64: 1, 128>}, {pipeline_mode = #tpu.pipeline_mode<synchronous>, transform_indices = @transform_9, window_bounds = array<i64: 128, 128>}, {pipeline_mode = #tpu.pipeline_mode<synchronous>, transform_indices = @transform_10, window_bounds = array<i64: 1, 128>}, {pipeline_mode = #tpu.pipeline_mode<synchronous>, transform_indices = @transform_11, window_bounds = array<i64: 128, 128>}, {pipeline_mode = #tpu.pipeline_mode<synchronous>, transform_indices = @transform_12, window_bounds = array<i64: 1, 128>}, {pipeline_mode = #tpu.pipeline_mode<synchronous>, transform_indices = @transform_13, window_bounds = array<i64: 128, 128>}, {pipeline_mode = #tpu.pipeline_mode<synchronous>, transform_indices = @transform_14, window_bounds = array<i64: 1, 128>}, {pipeline_mode = #tpu.pipeline_mode<synchronous>, transform_indices = @transform_15, window_bounds = array<i64: 128, 128>}, {pipeline_mode = #tpu.pipeline_mode<synchronous>, transform_indices = @transform_16, window_bounds = array<i64: 1, 128>}, {pipeline_mode = #tpu.pipeline_mode<synchronous>, transform_indices = @transform_17, window_bounds = array<i64: 128, 128>}, {pipeline_mode = #tpu.pipeline_mode<synchronous>, transform_indices = @transform_18, window_bounds = array<i64: 1, 128>}, {transform_indices = @transform_19, window_bounds = array<i64: 8, 128>}, {transform_indices = @transform_20, window_bounds = array<i64: 8, 128>}]} {
    %c0 = arith.constant 0 : index
    %c0_0 = arith.constant 0 : index
    %0 = vector.load %arg1[%c0, %c0_0] : memref<8x128xf32, #tpu.memory_space<vmem>>, vector<8x128xf32>
    %c0_1 = arith.constant 0 : index
    %c0_2 = arith.constant 0 : index
    %1 = vector.load %arg2[%c0_1, %c0_2] : memref<1x128xf32, #tpu.memory_space<vmem>>, vector<1x128xf32>
    %c0_3 = arith.constant 0 : index
    %c0_4 = arith.constant 0 : index
    %2 = vector.load %arg3[%c0_3, %c0_4] : memref<1x128xf32, #tpu.memory_space<vmem>>, vector<1x128xf32>
    %3 = vector.broadcast %1 : vector<1x128xf32> to vector<8x128xf32>
    %4 = arith.mulf %0, %3 : vector<8x128xf32>
    %c0_5 = arith.constant 0 : index
    %c0_6 = arith.constant 0 : index
    %5 = vector.load %arg4[%c0_5, %c0_6] : memref<128x128xf32, #tpu.memory_space<vmem>>, vector<128x128xf32>
    %cst = arith.constant dense<0.000000e+00> : vector<8x128xf32>
    %6 = tpu.matmul %4, %5, %cst {dimension_numbers = #tpu.dot_dimension_numbers<[1], [0], [0], [1], [0, 0, 1, 1], [], []>} : vector<8x128xf32>, vector<128x128xf32>, vector<8x128xf32> -> vector<8x128xf32>
    %c0_7 = arith.constant 0 : index
    %c0_8 = arith.constant 0 : index
    %7 = vector.load %arg5[%c0_7, %c0_8] : memref<1x128xf32, #tpu.memory_space<vmem>>, vector<1x128xf32>
    %8 = vector.broadcast %7 : vector<1x128xf32> to vector<8x128xf32>
    %9 = arith.addf %6, %8 : vector<8x128xf32>
    %10 = math.tanh %9 : vector<8x128xf32>
    %c0_9 = arith.constant 0 : index
    %c0_10 = arith.constant 0 : index
    %11 = vector.load %arg6[%c0_9, %c0_10] : memref<128x128xf32, #tpu.memory_space<vmem>>, vector<128x128xf32>
    %cst_11 = arith.constant dense<0.000000e+00> : vector<8x128xf32>
    %12 = tpu.matmul %10, %11, %cst_11 {dimension_numbers = #tpu.dot_dimension_numbers<[1], [0], [0], [1], [0, 0, 1, 1], [], []>} : vector<8x128xf32>, vector<128x128xf32>, vector<8x128xf32> -> vector<8x128xf32>
    %c0_12 = arith.constant 0 : index
    %c0_13 = arith.constant 0 : index
    %13 = vector.load %arg7[%c0_12, %c0_13] : memref<1x128xf32, #tpu.memory_space<vmem>>, vector<1x128xf32>
    %14 = vector.broadcast %13 : vector<1x128xf32> to vector<8x128xf32>
    %15 = arith.addf %12, %14 : vector<8x128xf32>
    %16 = math.tanh %15 : vector<8x128xf32>
    %c0_14 = arith.constant 0 : index
    %c0_15 = arith.constant 0 : index
    %17 = vector.load %arg8[%c0_14, %c0_15] : memref<128x128xf32, #tpu.memory_space<vmem>>, vector<128x128xf32>
    %cst_16 = arith.constant dense<0.000000e+00> : vector<8x128xf32>
    %18 = tpu.matmul %16, %17, %cst_16 {dimension_numbers = #tpu.dot_dimension_numbers<[1], [0], [0], [1], [0, 0, 1, 1], [], []>} : vector<8x128xf32>, vector<128x128xf32>, vector<8x128xf32> -> vector<8x128xf32>
    %c0_17 = arith.constant 0 : index
    %c0_18 = arith.constant 0 : index
    %19 = vector.load %arg9[%c0_17, %c0_18] : memref<1x128xf32, #tpu.memory_space<vmem>>, vector<1x128xf32>
    %20 = vector.broadcast %19 : vector<1x128xf32> to vector<8x128xf32>
    %21 = arith.addf %18, %20 : vector<8x128xf32>
    %22 = math.tanh %21 : vector<8x128xf32>
    %c0_19 = arith.constant 0 : index
    %c0_20 = arith.constant 0 : index
    %23 = vector.load %arg10[%c0_19, %c0_20] : memref<128x128xf32, #tpu.memory_space<vmem>>, vector<128x128xf32>
    %cst_21 = arith.constant dense<0.000000e+00> : vector<8x128xf32>
    %24 = tpu.matmul %22, %23, %cst_21 {dimension_numbers = #tpu.dot_dimension_numbers<[1], [0], [0], [1], [0, 0, 1, 1], [], []>} : vector<8x128xf32>, vector<128x128xf32>, vector<8x128xf32> -> vector<8x128xf32>
    %c0_22 = arith.constant 0 : index
    %c0_23 = arith.constant 0 : index
    %25 = vector.load %arg11[%c0_22, %c0_23] : memref<1x128xf32, #tpu.memory_space<vmem>>, vector<1x128xf32>
    %26 = vector.broadcast %25 : vector<1x128xf32> to vector<8x128xf32>
    %27 = arith.addf %24, %26 : vector<8x128xf32>
    %c0_24 = arith.constant 0 : index
    %c0_25 = arith.constant 0 : index
    %28 = vector.load %arg12[%c0_24, %c0_25] : memref<128x128xf32, #tpu.memory_space<vmem>>, vector<128x128xf32>
    %cst_26 = arith.constant dense<0.000000e+00> : vector<8x128xf32>
    %29 = tpu.matmul %4, %28, %cst_26 {dimension_numbers = #tpu.dot_dimension_numbers<[1], [0], [0], [1], [0, 0, 1, 1], [], []>} : vector<8x128xf32>, vector<128x128xf32>, vector<8x128xf32> -> vector<8x128xf32>
    %c0_27 = arith.constant 0 : index
    %c0_28 = arith.constant 0 : index
    %30 = vector.load %arg13[%c0_27, %c0_28] : memref<1x128xf32, #tpu.memory_space<vmem>>, vector<1x128xf32>
    %31 = vector.broadcast %30 : vector<1x128xf32> to vector<8x128xf32>
    %32 = arith.addf %29, %31 : vector<8x128xf32>
    %cst_29 = arith.constant 0.000000e+00 : f32
    %33 = vector.broadcast %cst_29 : f32 to vector<8x128xf32>
    %34 = arith.maximumf %32, %33 : vector<8x128xf32>
    %c0_30 = arith.constant 0 : index
    %c0_31 = arith.constant 0 : index
    %35 = vector.load %arg14[%c0_30, %c0_31] : memref<128x128xf32, #tpu.memory_space<vmem>>, vector<128x128xf32>
    %cst_32 = arith.constant dense<0.000000e+00> : vector<8x128xf32>
    %36 = tpu.matmul %34, %35, %cst_32 {dimension_numbers = #tpu.dot_dimension_numbers<[1], [0], [0], [1], [0, 0, 1, 1], [], []>} : vector<8x128xf32>, vector<128x128xf32>, vector<8x128xf32> -> vector<8x128xf32>
    %c0_33 = arith.constant 0 : index
    %c0_34 = arith.constant 0 : index
    %37 = vector.load %arg15[%c0_33, %c0_34] : memref<1x128xf32, #tpu.memory_space<vmem>>, vector<1x128xf32>
    %38 = vector.broadcast %37 : vector<1x128xf32> to vector<8x128xf32>
    %39 = arith.addf %36, %38 : vector<8x128xf32>
    %cst_35 = arith.constant 0.000000e+00 : f32
    %40 = vector.broadcast %cst_35 : f32 to vector<8x128xf32>
    %41 = arith.maximumf %39, %40 : vector<8x128xf32>
    %c0_36 = arith.constant 0 : index
    %c0_37 = arith.constant 0 : index
    %42 = vector.load %arg16[%c0_36, %c0_37] : memref<128x128xf32, #tpu.memory_space<vmem>>, vector<128x128xf32>
    %cst_38 = arith.constant dense<0.000000e+00> : vector<8x128xf32>
    %43 = tpu.matmul %41, %42, %cst_38 {dimension_numbers = #tpu.dot_dimension_numbers<[1], [0], [0], [1], [0, 0, 1, 1], [], []>} : vector<8x128xf32>, vector<128x128xf32>, vector<8x128xf32> -> vector<8x128xf32>
    %c0_39 = arith.constant 0 : index
    %c0_40 = arith.constant 0 : index
    %44 = vector.load %arg17[%c0_39, %c0_40] : memref<1x128xf32, #tpu.memory_space<vmem>>, vector<1x128xf32>
    %45 = vector.broadcast %44 : vector<1x128xf32> to vector<8x128xf32>
    %46 = arith.addf %43, %45 : vector<8x128xf32>
    %cst_41 = arith.constant 0.000000e+00 : f32
    %47 = vector.broadcast %cst_41 : f32 to vector<8x128xf32>
    %48 = arith.maximumf %46, %47 : vector<8x128xf32>
    %c0_42 = arith.constant 0 : index
    %c0_43 = arith.constant 0 : index
    %49 = vector.load %arg18[%c0_42, %c0_43] : memref<128x128xf32, #tpu.memory_space<vmem>>, vector<128x128xf32>
    %cst_44 = arith.constant dense<0.000000e+00> : vector<8x128xf32>
    %50 = tpu.matmul %48, %49, %cst_44 {dimension_numbers = #tpu.dot_dimension_numbers<[1], [0], [0], [1], [0, 0, 1, 1], [], []>} : vector<8x128xf32>, vector<128x128xf32>, vector<8x128xf32> -> vector<8x128xf32>
    %c0_45 = arith.constant 0 : index
    %c0_46 = arith.constant 0 : index
    %51 = vector.load %arg19[%c0_45, %c0_46] : memref<1x128xf32, #tpu.memory_space<vmem>>, vector<1x128xf32>
    %52 = vector.broadcast %51 : vector<1x128xf32> to vector<8x128xf32>
    %53 = arith.addf %50, %52 : vector<8x128xf32>
    %cst_47 = arith.constant 0.000000e+00 : f32
    %54 = vector.broadcast %cst_47 : f32 to vector<8x128xf32>
    %55 = arith.subf %54, %27 : vector<8x128xf32>
    %56 = math.exp %55 : vector<8x128xf32>
    %57 = arith.subf %0, %53 : vector<8x128xf32>
    %58 = vector.broadcast %2 : vector<1x128xf32> to vector<8x128xf32>
    %59 = arith.mulf %58, %57 : vector<8x128xf32>
    %60 = arith.mulf %59, %56 : vector<8x128xf32>
    %61 = arith.addf %4, %60 : vector<8x128xf32>
    %c0_48 = arith.constant 0 : index
    %c0_49 = arith.constant 0 : index
    %62 = vector.load %arg20[%c0_48, %c0_49] : memref<8x128xf32, #tpu.memory_space<vmem>>, vector<8x128xf32>
    tpu.vector_store %arg20[%c0_48, %c0_49], %61 {strides = array<i32>} : memref<8x128xf32, #tpu.memory_space<vmem>>, vector<8x128xf32>,
    %cst_50 = arith.constant 0.000000e+00 : f32
    %63 = vector.broadcast %cst_50 : f32 to vector<1x128xf32>
    %64 = arith.subf %63, %2 : vector<1x128xf32>
    %65 = vector.broadcast %64 : vector<1x128xf32> to vector<8x128xf32>
    %66 = arith.mulf %65, %27 : vector<8x128xf32>
    %c0_51 = arith.constant 0 : index
    %c0_52 = arith.constant 0 : index
    %67 = vector.load %arg21[%c0_51, %c0_52] : memref<8x128xf32, #tpu.memory_space<vmem>>, vector<8x128xf32>
    tpu.vector_store %arg21[%c0_51, %c0_52], %66 {strides = array<i32>} : memref<8x128xf32, #tpu.memory_space<vmem>>, vector<8x128xf32>,
    return
  }
  func.func @transform_0(%arg0: i32) -> (i32, i32) {
    %c0_i32 = arith.constant 0 : i32
    %c0_i32_0 = arith.constant 0 : i32
    return %arg0, %c0_i32 : i32, i32
  }
  func.func @transform_1(%arg0: i32) -> (i32, i32) {
    %c0_i32 = arith.constant 0 : i32
    %c0_i32_0 = arith.constant 0 : i32
    %c0_i32_1 = arith.constant 0 : i32
    return %c0_i32, %c0_i32_0 : i32, i32
  }
  func.func @transform_2(%arg0: i32) -> (i32, i32) {
    %c0_i32 = arith.constant 0 : i32
    %c0_i32_0 = arith.constant 0 : i32
    %c0_i32_1 = arith.constant 0 : i32
    return %c0_i32, %c0_i32_0 : i32, i32
  }
  func.func @transform_3(%arg0: i32) -> (i32, i32) {
    %c0_i32 = arith.constant 0 : i32
    %c0_i32_0 = arith.constant 0 : i32
    %c0_i32_1 = arith.constant 0 : i32
    return %c0_i32, %c0_i32_0 : i32, i32
  }
  func.func @transform_4(%arg0: i32) -> (i32, i32) {
    %c0_i32 = arith.constant 0 : i32
    %c0_i32_0 = arith.constant 0 : i32
    %c0_i32_1 = arith.constant 0 : i32
    return %c0_i32, %c0_i32_0 : i32, i32
  }
  func.func @transform_5(%arg0: i32) -> (i32, i32) {
    %c0_i32 = arith.constant 0 : i32
    %c0_i32_0 = arith.constant 0 : i32
    %c0_i32_1 = arith.constant 0 : i32
    return %c0_i32, %c0_i32_0 : i32, i32
  }
  func.func @transform_6(%arg0: i32) -> (i32, i32) {
    %c0_i32 = arith.constant 0 : i32
    %c0_i32_0 = arith.constant 0 : i32
    %c0_i32_1 = arith.constant 0 : i32
    return %c0_i32, %c0_i32_0 : i32, i32
  }
  func.func @transform_7(%arg0: i32) -> (i32, i32) {
    %c0_i32 = arith.constant 0 : i32
    %c0_i32_0 = arith.constant 0 : i32
    %c0_i32_1 = arith.constant 0 : i32
    return %c0_i32, %c0_i32_0 : i32, i32
  }
  func.func @transform_8(%arg0: i32) -> (i32, i32) {
    %c0_i32 = arith.constant 0 : i32
    %c0_i32_0 = arith.constant 0 : i32
    %c0_i32_1 = arith.constant 0 : i32
    return %c0_i32, %c0_i32_0 : i32, i32
  }
  func.func @transform_9(%arg0: i32) -> (i32, i32) {
    %c0_i32 = arith.constant 0 : i32
    %c0_i32_0 = arith.constant 0 : i32
    %c0_i32_1 = arith.constant 0 : i32
    return %c0_i32, %c0_i32_0 : i32, i32
  }
  func.func @transform_10(%arg0: i32) -> (i32, i32) {
    %c0_i32 = arith.constant 0 : i32
    %c0_i32_0 = arith.constant 0 : i32
    %c0_i32_1 = arith.constant 0 : i32
    return %c0_i32, %c0_i32_0 : i32, i32
  }
  func.func @transform_11(%arg0: i32) -> (i32, i32) {
    %c0_i32 = arith.constant 0 : i32
    %c0_i32_0 = arith.constant 0 : i32
    %c0_i32_1 = arith.constant 0 : i32
    return %c0_i32, %c0_i32_0 : i32, i32
  }
  func.func @transform_12(%arg0: i32) -> (i32, i32) {
    %c0_i32 = arith.constant 0 : i32
    %c0_i32_0 = arith.constant 0 : i32
    %c0_i32_1 = arith.constant 0 : i32
    return %c0_i32, %c0_i32_0 : i32, i32
  }
  func.func @transform_13(%arg0: i32) -> (i32, i32) {
    %c0_i32 = arith.constant 0 : i32
    %c0_i32_0 = arith.constant 0 : i32
    %c0_i32_1 = arith.constant 0 : i32
    return %c0_i32, %c0_i32_0 : i32, i32
  }
  func.func @transform_14(%arg0: i32) -> (i32, i32) {
    %c0_i32 = arith.constant 0 : i32
    %c0_i32_0 = arith.constant 0 : i32
    %c0_i32_1 = arith.constant 0 : i32
    return %c0_i32, %c0_i32_0 : i32, i32
  }
  func.func @transform_15(%arg0: i32) -> (i32, i32) {
    %c0_i32 = arith.constant 0 : i32
    %c0_i32_0 = arith.constant 0 : i32
    %c0_i32_1 = arith.constant 0 : i32
    return %c0_i32, %c0_i32_0 : i32, i32
  }
  func.func @transform_16(%arg0: i32) -> (i32, i32) {
    %c0_i32 = arith.constant 0 : i32
    %c0_i32_0 = arith.constant 0 : i32
    %c0_i32_1 = arith.constant 0 : i32
    return %c0_i32, %c0_i32_0 : i32, i32
  }
  func.func @transform_17(%arg0: i32) -> (i32, i32) {
    %c0_i32 = arith.constant 0 : i32
    %c0_i32_0 = arith.constant 0 : i32
    %c0_i32_1 = arith.constant 0 : i32
    return %c0_i32, %c0_i32_0 : i32, i32
  }
  func.func @transform_18(%arg0: i32) -> (i32, i32) {
    %c0_i32 = arith.constant 0 : i32
    %c0_i32_0 = arith.constant 0 : i32
    %c0_i32_1 = arith.constant 0 : i32
    return %c0_i32, %c0_i32_0 : i32, i32
  }
  func.func @transform_19(%arg0: i32) -> (i32, i32) {
    %c0_i32 = arith.constant 0 : i32
    %c0_i32_0 = arith.constant 0 : i32
    return %arg0, %c0_i32 : i32, i32
  }
  func.func @transform_20(%arg0: i32) -> (i32, i32) {
    %c0_i32 = arith.constant 0 : i32
    %c0_i32_0 = arith.constant 0 : i32
    return %arg0, %c0_i32 : i32, i32
  }
}

module attributes {stable_mosaic.version = 11 : i64} {
  func.func @_coupling_kernel(%arg0: i32, %arg1: memref<8x128xf32, #tpu.memory_space<vmem>>, %arg2: memref<1x128xf32, #tpu.memory_space<vmem>>, %arg3: memref<1x128xf32, #tpu.memory_space<vmem>>, %arg4: memref<128x128xf32, #tpu.memory_space<vmem>>, %arg5: memref<1x128xf32, #tpu.memory_space<vmem>>, %arg6: memref<128x128xf32, #tpu.memory_space<vmem>>, %arg7: memref<1x128xf32, #tpu.memory_space<vmem>>, %arg8: memref<128x128xf32, #tpu.memory_space<vmem>>, %arg9: memref<1x128xf32, #tpu.memory_space<vmem>>, %arg10: memref<128x128xf32, #tpu.memory_space<vmem>>, %arg11: memref<1x128xf32, #tpu.memory_space<vmem>>, %arg12: memref<128x128xf32, #tpu.memory_space<vmem>>, %arg13: memref<1x128xf32, #tpu.memory_space<vmem>>, %arg14: memref<128x128xf32, #tpu.memory_space<vmem>>, %arg15: memref<1x128xf32, #tpu.memory_space<vmem>>, %arg16: memref<128x128xf32, #tpu.memory_space<vmem>>, %arg17: memref<1x128xf32, #tpu.memory_space<vmem>>, %arg18: memref<128x128xf32, #tpu.memory_space<vmem>>, %arg19: memref<1x128xf32, #tpu.memory_space<vmem>>, %arg20: memref<8x128xf32, #tpu.memory_space<vmem>>, %arg21: memref<8x128xf32, #tpu.memory_space<vmem>>) attributes {dimension_semantics = [#tpu.dimension_semantics<parallel>], iteration_bounds = array<i64: 1>, scalar_prefetch = 0 : i64, scratch_operands = 0 : i64, tpu.core_type = #tpu.core_type<tc>, window_params = [{transform_indices = @transform_0, window_bounds = array<i64: 8, 128>}, {pipeline_mode = #tpu.pipeline_mode<synchronous>, transform_indices = @transform_1, window_bounds = array<i64: 1, 128>}, {pipeline_mode = #tpu.pipeline_mode<synchronous>, transform_indices = @transform_2, window_bounds = array<i64: 1, 128>}, {pipeline_mode = #tpu.pipeline_mode<synchronous>, transform_indices = @transform_3, window_bounds = array<i64: 128, 128>}, {pipeline_mode = #tpu.pipeline_mode<synchronous>, transform_indices = @transform_4, window_bounds = array<i64: 1, 128>}, {pipeline_mode = #tpu.pipeline_mode<synchronous>, transform_indices = @transform_5, window_bounds = array<i64: 128, 128>}, {pipeline_mode = #tpu.pipeline_mode<synchronous>, transform_indices = @transform_6, window_bounds = array<i64: 1, 128>}, {pipeline_mode = #tpu.pipeline_mode<synchronous>, transform_indices = @transform_7, window_bounds = array<i64: 128, 128>}, {pipeline_mode = #tpu.pipeline_mode<synchronous>, transform_indices = @transform_8, window_bounds = array<i64: 1, 128>}, {pipeline_mode = #tpu.pipeline_mode<synchronous>, transform_indices = @transform_9, window_bounds = array<i64: 128, 128>}, {pipeline_mode = #tpu.pipeline_mode<synchronous>, transform_indices = @transform_10, window_bounds = array<i64: 1, 128>}, {pipeline_mode = #tpu.pipeline_mode<synchronous>, transform_indices = @transform_11, window_bounds = array<i64: 128, 128>}, {pipeline_mode = #tpu.pipeline_mode<synchronous>, transform_indices = @transform_12, window_bounds = array<i64: 1, 128>}, {pipeline_mode = #tpu.pipeline_mode<synchronous>, transform_indices = @transform_13, window_bounds = array<i64: 128, 128>}, {pipeline_mode = #tpu.pipeline_mode<synchronous>, transform_indices = @transform_14, window_bounds = array<i64: 1, 128>}, {pipeline_mode = #tpu.pipeline_mode<synchronous>, transform_indices = @transform_15, window_bounds = array<i64: 128, 128>}, {pipeline_mode = #tpu.pipeline_mode<synchronous>, transform_indices = @transform_16, window_bounds = array<i64: 1, 128>}, {pipeline_mode = #tpu.pipeline_mode<synchronous>, transform_indices = @transform_17, window_bounds = array<i64: 128, 128>}, {pipeline_mode = #tpu.pipeline_mode<synchronous>, transform_indices = @transform_18, window_bounds = array<i64: 1, 128>}, {transform_indices = @transform_19, window_bounds = array<i64: 8, 128>}, {transform_indices = @transform_20, window_bounds = array<i64: 8, 128>}]} {
    %c0 = arith.constant 0 : index
    %c0_0 = arith.constant 0 : index
    %0 = vector.load %arg1[%c0, %c0_0] : memref<8x128xf32, #tpu.memory_space<vmem>>, vector<8x128xf32>
    %c0_1 = arith.constant 0 : index
    %c0_2 = arith.constant 0 : index
    %1 = vector.load %arg2[%c0_1, %c0_2] : memref<1x128xf32, #tpu.memory_space<vmem>>, vector<1x128xf32>
    %c0_3 = arith.constant 0 : index
    %c0_4 = arith.constant 0 : index
    %2 = vector.load %arg3[%c0_3, %c0_4] : memref<1x128xf32, #tpu.memory_space<vmem>>, vector<1x128xf32>
    %3 = vector.broadcast %1 : vector<1x128xf32> to vector<8x128xf32>
    %4 = arith.mulf %0, %3 : vector<8x128xf32>
    %c0_5 = arith.constant 0 : index
    %c0_6 = arith.constant 0 : index
    %5 = vector.load %arg4[%c0_5, %c0_6] : memref<128x128xf32, #tpu.memory_space<vmem>>, vector<128x128xf32>
    %cst = arith.constant dense<0.000000e+00> : vector<8x128xf32>
    %6 = tpu.matmul %4, %5, %cst {dimension_numbers = #tpu.dot_dimension_numbers<[1], [0], [0], [1], [0, 0, 1, 1], [], []>} : vector<8x128xf32>, vector<128x128xf32>, vector<8x128xf32> -> vector<8x128xf32>
    %c0_7 = arith.constant 0 : index
    %c0_8 = arith.constant 0 : index
    %7 = vector.load %arg5[%c0_7, %c0_8] : memref<1x128xf32, #tpu.memory_space<vmem>>, vector<1x128xf32>
    %8 = vector.broadcast %7 : vector<1x128xf32> to vector<8x128xf32>
    %9 = arith.addf %6, %8 : vector<8x128xf32>
    %10 = math.tanh %9 : vector<8x128xf32>
    %c0_9 = arith.constant 0 : index
    %c0_10 = arith.constant 0 : index
    %11 = vector.load %arg6[%c0_9, %c0_10] : memref<128x128xf32, #tpu.memory_space<vmem>>, vector<128x128xf32>
    %cst_11 = arith.constant dense<0.000000e+00> : vector<8x128xf32>
    %12 = tpu.matmul %10, %11, %cst_11 {dimension_numbers = #tpu.dot_dimension_numbers<[1], [0], [0], [1], [0, 0, 1, 1], [], []>} : vector<8x128xf32>, vector<128x128xf32>, vector<8x128xf32> -> vector<8x128xf32>
    %c0_12 = arith.constant 0 : index
    %c0_13 = arith.constant 0 : index
    %13 = vector.load %arg7[%c0_12, %c0_13] : memref<1x128xf32, #tpu.memory_space<vmem>>, vector<1x128xf32>
    %14 = vector.broadcast %13 : vector<1x128xf32> to vector<8x128xf32>
    %15 = arith.addf %12, %14 : vector<8x128xf32>
    %16 = math.tanh %15 : vector<8x128xf32>
    %c0_14 = arith.constant 0 : index
    %c0_15 = arith.constant 0 : index
    %17 = vector.load %arg8[%c0_14, %c0_15] : memref<128x128xf32, #tpu.memory_space<vmem>>, vector<128x128xf32>
    %cst_16 = arith.constant dense<0.000000e+00> : vector<8x128xf32>
    %18 = tpu.matmul %16, %17, %cst_16 {dimension_numbers = #tpu.dot_dimension_numbers<[1], [0], [0], [1], [0, 0, 1, 1], [], []>} : vector<8x128xf32>, vector<128x128xf32>, vector<8x128xf32> -> vector<8x128xf32>
    %c0_17 = arith.constant 0 : index
    %c0_18 = arith.constant 0 : index
    %19 = vector.load %arg9[%c0_17, %c0_18] : memref<1x128xf32, #tpu.memory_space<vmem>>, vector<1x128xf32>
    %20 = vector.broadcast %19 : vector<1x128xf32> to vector<8x128xf32>
    %21 = arith.addf %18, %20 : vector<8x128xf32>
    %22 = math.tanh %21 : vector<8x128xf32>
    %c0_19 = arith.constant 0 : index
    %c0_20 = arith.constant 0 : index
    %23 = vector.load %arg10[%c0_19, %c0_20] : memref<128x128xf32, #tpu.memory_space<vmem>>, vector<128x128xf32>
    %cst_21 = arith.constant dense<0.000000e+00> : vector<8x128xf32>
    %24 = tpu.matmul %22, %23, %cst_21 {dimension_numbers = #tpu.dot_dimension_numbers<[1], [0], [0], [1], [0, 0, 1, 1], [], []>} : vector<8x128xf32>, vector<128x128xf32>, vector<8x128xf32> -> vector<8x128xf32>
    %c0_22 = arith.constant 0 : index
    %c0_23 = arith.constant 0 : index
    %25 = vector.load %arg11[%c0_22, %c0_23] : memref<1x128xf32, #tpu.memory_space<vmem>>, vector<1x128xf32>
    %26 = vector.broadcast %25 : vector<1x128xf32> to vector<8x128xf32>
    %27 = arith.addf %24, %26 : vector<8x128xf32>
    %c0_24 = arith.constant 0 : index
    %c0_25 = arith.constant 0 : index
    %28 = vector.load %arg12[%c0_24, %c0_25] : memref<128x128xf32, #tpu.memory_space<vmem>>, vector<128x128xf32>
    %cst_26 = arith.constant dense<0.000000e+00> : vector<8x128xf32>
    %29 = tpu.matmul %4, %28, %cst_26 {dimension_numbers = #tpu.dot_dimension_numbers<[1], [0], [0], [1], [0, 0, 1, 1], [], []>} : vector<8x128xf32>, vector<128x128xf32>, vector<8x128xf32> -> vector<8x128xf32>
    %c0_27 = arith.constant 0 : index
    %c0_28 = arith.constant 0 : index
    %30 = vector.load %arg13[%c0_27, %c0_28] : memref<1x128xf32, #tpu.memory_space<vmem>>, vector<1x128xf32>
    %31 = vector.broadcast %30 : vector<1x128xf32> to vector<8x128xf32>
    %32 = arith.addf %29, %31 : vector<8x128xf32>
    %cst_29 = arith.constant 0.000000e+00 : f32
    %33 = vector.broadcast %cst_29 : f32 to vector<8x128xf32>
    %34 = arith.maximumf %32, %33 : vector<8x128xf32>
    %c0_30 = arith.constant 0 : index
    %c0_31 = arith.constant 0 : index
    %35 = vector.load %arg14[%c0_30, %c0_31] : memref<128x128xf32, #tpu.memory_space<vmem>>, vector<128x128xf32>
    %cst_32 = arith.constant dense<0.000000e+00> : vector<8x128xf32>
    %36 = tpu.matmul %34, %35, %cst_32 {dimension_numbers = #tpu.dot_dimension_numbers<[1], [0], [0], [1], [0, 0, 1, 1], [], []>} : vector<8x128xf32>, vector<128x128xf32>, vector<8x128xf32> -> vector<8x128xf32>
    %c0_33 = arith.constant 0 : index
    %c0_34 = arith.constant 0 : index
    %37 = vector.load %arg15[%c0_33, %c0_34] : memref<1x128xf32, #tpu.memory_space<vmem>>, vector<1x128xf32>
    %38 = vector.broadcast %37 : vector<1x128xf32> to vector<8x128xf32>
    %39 = arith.addf %36, %38 : vector<8x128xf32>
    %cst_35 = arith.constant 0.000000e+00 : f32
    %40 = vector.broadcast %cst_35 : f32 to vector<8x128xf32>
    %41 = arith.maximumf %39, %40 : vector<8x128xf32>
    %c0_36 = arith.constant 0 : index
    %c0_37 = arith.constant 0 : index
    %42 = vector.load %arg16[%c0_36, %c0_37] : memref<128x128xf32, #tpu.memory_space<vmem>>, vector<128x128xf32>
    %cst_38 = arith.constant dense<0.000000e+00> : vector<8x128xf32>
    %43 = tpu.matmul %41, %42, %cst_38 {dimension_numbers = #tpu.dot_dimension_numbers<[1], [0], [0], [1], [0, 0, 1, 1], [], []>} : vector<8x128xf32>, vector<128x128xf32>, vector<8x128xf32> -> vector<8x128xf32>
    %c0_39 = arith.constant 0 : index
    %c0_40 = arith.constant 0 : index
    %44 = vector.load %arg17[%c0_39, %c0_40] : memref<1x128xf32, #tpu.memory_space<vmem>>, vector<1x128xf32>
    %45 = vector.broadcast %44 : vector<1x128xf32> to vector<8x128xf32>
    %46 = arith.addf %43, %45 : vector<8x128xf32>
    %cst_41 = arith.constant 0.000000e+00 : f32
    %47 = vector.broadcast %cst_41 : f32 to vector<8x128xf32>
    %48 = arith.maximumf %46, %47 : vector<8x128xf32>
    %c0_42 = arith.constant 0 : index
    %c0_43 = arith.constant 0 : index
    %49 = vector.load %arg18[%c0_42, %c0_43] : memref<128x128xf32, #tpu.memory_space<vmem>>, vector<128x128xf32>
    %cst_44 = arith.constant dense<0.000000e+00> : vector<8x128xf32>
    %50 = tpu.matmul %48, %49, %cst_44 {dimension_numbers = #tpu.dot_dimension_numbers<[1], [0], [0], [1], [0, 0, 1, 1], [], []>} : vector<8x128xf32>, vector<128x128xf32>, vector<8x128xf32> -> vector<8x128xf32>
    %c0_45 = arith.constant 0 : index
    %c0_46 = arith.constant 0 : index
    %51 = vector.load %arg19[%c0_45, %c0_46] : memref<1x128xf32, #tpu.memory_space<vmem>>, vector<1x128xf32>
    %52 = vector.broadcast %51 : vector<1x128xf32> to vector<8x128xf32>
    %53 = arith.addf %50, %52 : vector<8x128xf32>
    %cst_47 = arith.constant 0.000000e+00 : f32
    %54 = vector.broadcast %cst_47 : f32 to vector<8x128xf32>
    %55 = arith.subf %54, %27 : vector<8x128xf32>
    %56 = math.exp %55 : vector<8x128xf32>
    %57 = arith.subf %0, %53 : vector<8x128xf32>
    %58 = vector.broadcast %2 : vector<1x128xf32> to vector<8x128xf32>
    %59 = arith.mulf %58, %57 : vector<8x128xf32>
    %60 = arith.mulf %59, %56 : vector<8x128xf32>
    %61 = arith.addf %4, %60 : vector<8x128xf32>
    %c0_48 = arith.constant 0 : index
    %c0_49 = arith.constant 0 : index
    %62 = vector.load %arg20[%c0_48, %c0_49] : memref<8x128xf32, #tpu.memory_space<vmem>>, vector<8x128xf32>
    tpu.vector_store %arg20[%c0_48, %c0_49], %61 {strides = array<i32>} : memref<8x128xf32, #tpu.memory_space<vmem>>, vector<8x128xf32>,
    %cst_50 = arith.constant 0.000000e+00 : f32
    %63 = vector.broadcast %cst_50 : f32 to vector<1x128xf32>
    %64 = arith.subf %63, %2 : vector<1x128xf32>
    %65 = vector.broadcast %64 : vector<1x128xf32> to vector<8x128xf32>
    %66 = arith.mulf %65, %27 : vector<8x128xf32>
    %c0_51 = arith.constant 0 : index
    %c0_52 = arith.constant 0 : index
    %67 = vector.load %arg21[%c0_51, %c0_52] : memref<8x128xf32, #tpu.memory_space<vmem>>, vector<8x128xf32>
    tpu.vector_store %arg21[%c0_51, %c0_52], %66 {strides = array<i32>} : memref<8x128xf32, #tpu.memory_space<vmem>>, vector<8x128xf32>,
    return
  }
  func.func @transform_0(%arg0: i32) -> (i32, i32) {
    %c0_i32 = arith.constant 0 : i32
    %c0_i32_0 = arith.constant 0 : i32
    return %arg0, %c0_i32 : i32, i32
  }
  func.func @transform_1(%arg0: i32) -> (i32, i32) {
    %c0_i32 = arith.constant 0 : i32
    %c0_i32_0 = arith.constant 0 : i32
    %c0_i32_1 = arith.constant 0 : i32
    return %c0_i32, %c0_i32_0 : i32, i32
  }
  func.func @transform_2(%arg0: i32) -> (i32, i32) {
    %c0_i32 = arith.constant 0 : i32
    %c0_i32_0 = arith.constant 0 : i32
    %c0_i32_1 = arith.constant 0 : i32
    return %c0_i32, %c0_i32_0 : i32, i32
  }
  func.func @transform_3(%arg0: i32) -> (i32, i32) {
    %c0_i32 = arith.constant 0 : i32
    %c0_i32_0 = arith.constant 0 : i32
    %c0_i32_1 = arith.constant 0 : i32
    return %c0_i32, %c0_i32_0 : i32, i32
  }
  func.func @transform_4(%arg0: i32) -> (i32, i32) {
    %c0_i32 = arith.constant 0 : i32
    %c0_i32_0 = arith.constant 0 : i32
    %c0_i32_1 = arith.constant 0 : i32
    return %c0_i32, %c0_i32_0 : i32, i32
  }
  func.func @transform_5(%arg0: i32) -> (i32, i32) {
    %c0_i32 = arith.constant 0 : i32
    %c0_i32_0 = arith.constant 0 : i32
    %c0_i32_1 = arith.constant 0 : i32
    return %c0_i32, %c0_i32_0 : i32, i32
  }
  func.func @transform_6(%arg0: i32) -> (i32, i32) {
    %c0_i32 = arith.constant 0 : i32
    %c0_i32_0 = arith.constant 0 : i32
    %c0_i32_1 = arith.constant 0 : i32
    return %c0_i32, %c0_i32_0 : i32, i32
  }
  func.func @transform_7(%arg0: i32) -> (i32, i32) {
    %c0_i32 = arith.constant 0 : i32
    %c0_i32_0 = arith.constant 0 : i32
    %c0_i32_1 = arith.constant 0 : i32
    return %c0_i32, %c0_i32_0 : i32, i32
  }
  func.func @transform_8(%arg0: i32) -> (i32, i32) {
    %c0_i32 = arith.constant 0 : i32
    %c0_i32_0 = arith.constant 0 : i32
    %c0_i32_1 = arith.constant 0 : i32
    return %c0_i32, %c0_i32_0 : i32, i32
  }
  func.func @transform_9(%arg0: i32) -> (i32, i32) {
    %c0_i32 = arith.constant 0 : i32
    %c0_i32_0 = arith.constant 0 : i32
    %c0_i32_1 = arith.constant 0 : i32
    return %c0_i32, %c0_i32_0 : i32, i32
  }
  func.func @transform_10(%arg0: i32) -> (i32, i32) {
    %c0_i32 = arith.constant 0 : i32
    %c0_i32_0 = arith.constant 0 : i32
    %c0_i32_1 = arith.constant 0 : i32
    return %c0_i32, %c0_i32_0 : i32, i32
  }
  func.func @transform_11(%arg0: i32) -> (i32, i32) {
    %c0_i32 = arith.constant 0 : i32
    %c0_i32_0 = arith.constant 0 : i32
    %c0_i32_1 = arith.constant 0 : i32
    return %c0_i32, %c0_i32_0 : i32, i32
  }
  func.func @transform_12(%arg0: i32) -> (i32, i32) {
    %c0_i32 = arith.constant 0 : i32
    %c0_i32_0 = arith.constant 0 : i32
    %c0_i32_1 = arith.constant 0 : i32
    return %c0_i32, %c0_i32_0 : i32, i32
  }
  func.func @transform_13(%arg0: i32) -> (i32, i32) {
    %c0_i32 = arith.constant 0 : i32
    %c0_i32_0 = arith.constant 0 : i32
    %c0_i32_1 = arith.constant 0 : i32
    return %c0_i32, %c0_i32_0 : i32, i32
  }
  func.func @transform_14(%arg0: i32) -> (i32, i32) {
    %c0_i32 = arith.constant 0 : i32
    %c0_i32_0 = arith.constant 0 : i32
    %c0_i32_1 = arith.constant 0 : i32
    return %c0_i32, %c0_i32_0 : i32, i32
  }
  func.func @transform_15(%arg0: i32) -> (i32, i32) {
    %c0_i32 = arith.constant 0 : i32
    %c0_i32_0 = arith.constant 0 : i32
    %c0_i32_1 = arith.constant 0 : i32
    return %c0_i32, %c0_i32_0 : i32, i32
  }
  func.func @transform_16(%arg0: i32) -> (i32, i32) {
    %c0_i32 = arith.constant 0 : i32
    %c0_i32_0 = arith.constant 0 : i32
    %c0_i32_1 = arith.constant 0 : i32
    return %c0_i32, %c0_i32_0 : i32, i32
  }
  func.func @transform_17(%arg0: i32) -> (i32, i32) {
    %c0_i32 = arith.constant 0 : i32
    %c0_i32_0 = arith.constant 0 : i32
    %c0_i32_1 = arith.constant 0 : i32
    return %c0_i32, %c0_i32_0 : i32, i32
  }
  func.func @transform_18(%arg0: i32) -> (i32, i32) {
    %c0_i32 = arith.constant 0 : i32
    %c0_i32_0 = arith.constant 0 : i32
    %c0_i32_1 = arith.constant 0 : i32
    return %c0_i32, %c0_i32_0 : i32, i32
  }
  func.func @transform_19(%arg0: i32) -> (i32, i32) {
    %c0_i32 = arith.constant 0 : i32
    %c0_i32_0 = arith.constant 0 : i32
    return %arg0, %c0_i32 : i32, i32
  }
  func.func @transform_20(%arg0: i32) -> (i32, i32) {
    %c0_i32 = arith.constant 0 : i32
    %c0_i32_0 = arith.constant 0 : i32
    return %arg0, %c0_i32 : i32, i32
  }
}

</mosaic_0001>

<llo_original>
// kernel: tpu_custom_call.1
$region0: #{tpu_custom_call.1}
  #allocation0 [shape = 'u32[]', space=smem, size = 0x4, offset = 0x4, fixed_abs, tag = 'smem constant byte address 0x4 - core index']
  #allocation1 [shape = 'u32[144,128]{1,0:T(1,128)}', space=vmem, size = 0x12000, scoped, tag = 'internal scratch']
  %s0 = inlined_call_operand.hbm [shape: f32[8,128], index: 0, kind: input, shape index: {}]
  %s1 = inlined_call_operand.vmem [shape: f32[1,128], index: 1, kind: input, shape index: {}]
  %s2 = inlined_call_operand.vmem [shape: f32[1,128], index: 2, kind: input, shape index: {}]
  %s3 = inlined_call_operand.hbm [shape: f32[128,128], index: 3, kind: input, shape index: {}]
  %s4 = inlined_call_operand.vmem [shape: f32[1,128], index: 4, kind: input, shape index: {}]
  %s5 = inlined_call_operand.hbm [shape: f32[128,128], index: 5, kind: input, shape index: {}]
  %s6 = inlined_call_operand.vmem [shape: f32[1,128], index: 6, kind: input, shape index: {}]
  %s7 = inlined_call_operand.hbm [shape: f32[128,128], index: 7, kind: input, shape index: {}]
  %s8 = inlined_call_operand.vmem [shape: f32[1,128], index: 8, kind: input, shape index: {}]
  %s9 = inlined_call_operand.hbm [shape: f32[128,128], index: 9, kind: input, shape index: {}]
  %s10 = inlined_call_operand.vmem [shape: f32[1,128], index: 10, kind: input, shape index: {}]
  %s11 = inlined_call_operand.hbm [shape: f32[128,128], index: 11, kind: input, shape index: {}]
  %s12 = inlined_call_operand.vmem [shape: f32[1,128], index: 12, kind: input, shape index: {}]
  %s13 = inlined_call_operand.hbm [shape: f32[128,128], index: 13, kind: input, shape index: {}]
  %s14 = inlined_call_operand.vmem [shape: f32[1,128], index: 14, kind: input, shape index: {}]
  %s15 = inlined_call_operand.hbm [shape: f32[128,128], index: 15, kind: input, shape index: {}]
  %s16 = inlined_call_operand.vmem [shape: f32[1,128], index: 16, kind: input, shape index: {}]
  %s17 = inlined_call_operand.hbm [shape: f32[128,128], index: 17, kind: input, shape index: {}]
  %s18 = inlined_call_operand.vmem [shape: f32[1,128], index: 18, kind: input, shape index: {}]
  %s19 = inlined_call_operand.hbm [shape: f32[8,128], index: 19, kind: output, shape index: {0}]
  %s20 = inlined_call_operand.hbm [shape: f32[8,128], index: 20, kind: output, shape index: {1}]
  %21 = xla_tuple %s19, %s20
  %s22 = sld [smem:[#allocation0]]
  $region130: #{tpu_custom_call.1} parent=0
    _
  %s24 = ssub.s32 1, %s22
  %s25 = scalar_select 0, %s24, %s22
  $region1: #{tpu_custom_call.1} parent=0
    #allocation2 [shape = 'u8[4096]{0}', space=vmem, size = 0x1000, scoped, tag = 'input window, operand 0, single buffered']
    #allocation3 [shape = 's32[1]{0}', space=sflag, size = 0x4, scoped, tag = 'scoped memory for tpu_custom_call.1']
    #allocation4 [shape = 's32[1]{0}', space=sflag, size = 0x4, scoped, tag = 'scoped memory for tpu_custom_call.1']
    #allocation5 [shape = 'u8[65536]{0}', space=vmem, size = 0x10000, scoped, tag = 'input window, operand 3, single buffered']
    #allocation6 [shape = 's32[1]{0}', space=sflag, size = 0x4, scoped, tag = 'scoped memory for tpu_custom_call.1']
    #allocation7 [shape = 'u8[65536]{0}', space=vmem, size = 0x10000, scoped, tag = 'input window, operand 5, single buffered']
    #allocation8 [shape = 'u8[65536]{0}', space=vmem, size = 0x10000, scoped, tag = 'input window, operand 7, single buffered']
    #allocation9 [shape = 's32[1]{0}', space=sflag, size = 0x4, scoped, tag = 'scoped memory for tpu_custom_call.1']
    #allocation10 [shape = 'u8[65536]{0}', space=vmem, size = 0x10000, scoped, tag = 'input window, operand 9, single buffered']
    #allocation11 [shape = 'u8[65536]{0}', space=vmem, size = 0x10000, scoped, tag = 'input window, operand 11, single buffered']
    #allocation12 [shape = 's32[1]{0}', space=sflag, size = 0x4, scoped, tag = 'scoped memory for tpu_custom_call.1']
    #allocation13 [shape = 'u8[65536]{0}', space=vmem, size = 0x10000, scoped, tag = 'input window, operand 13, single buffered']
    #allocation14 [shape = 'u8[65536]{0}', space=vmem, size = 0x10000, scoped, tag = 'input window, operand 15, single buffered']
    #allocation15 [shape = 's32[1]{0}', space=sflag, size = 0x4, scoped, tag = 'scoped memory for tpu_custom_call.1']
    #allocation16 [shape = 'u8[65536]{0}', space=vmem, size = 0x10000, scoped, tag = 'input window, operand 17, single buffered']
    #allocation17 [shape = 'u8[4096]{0}', space=vmem, size = 0x1000, scoped, tag = 'output window, operand 0, single buffered']
    #allocation18 [shape = 'u8[4096]{0}', space=vmem, size = 0x1000, scoped, tag = 'output window, operand 1, single buffered']
    #allocation19 [shape = 's32[1]{0}', space=sflag, size = 0x4, scoped, tag = 'scoped memory for tpu_custom_call.1']
    %26 = vsyncpa [#allocation3], 0
    %27 = vsyncpa [#allocation6], 0
    %28 = vsyncpa [#allocation9], 0
    %29 = vsyncpa [#allocation12], 0
    %30 = vsyncpa [#allocation15], 0
    %31 = vsyncpa [#allocation4], 0
    %32 = vsyncpa [#allocation19], 0
    // Predicated region
    $region2: #{tpu_custom_call.1} parent=1 // pred_check
      _
    $region3: #{tpu_custom_call.1} parent=1 // pred_check_branch
      %34 = sbr.rel (0) target = $region5
    $region4: #{tpu_custom_call.1} parent=1 // pred_region
      %s36 = ssub.s32 128, 128
      %37 = vsyncadd [#allocation3], %s36
      %s39 = sshll.u32 [#allocation2], 4
      %s40 = int_to_ptr.vmem [resolvable:$true] %s39
      %42 = dma.hbm_to_vmem [thread:$0]  %s0, 128, %s40, [#allocation3]
    $region5: #{tpu_custom_call.1} parent=1 // pred_fallthru
      _
    // Predicated region
    $region6: #{tpu_custom_call.1} parent=1 // pred_check
      _
    $region7: #{tpu_custom_call.1} parent=1 // pred_check_branch
      %44 = sbr.rel (0) target = $region9
    $region8: #{tpu_custom_call.1} parent=1 // pred_region
      _
    $region9: #{tpu_custom_call.1} parent=1 // pred_fallthru
      _
    // Predicated region
    $region10: #{tpu_custom_call.1} parent=1 // pred_check
      _
    $region11: #{tpu_custom_call.1} parent=1 // pred_check_branch
      %46 = sbr.rel (0) target = $region13
    $region12: #{tpu_custom_call.1} parent=1 // pred_region
      _
    $region13: #{tpu_custom_call.1} parent=1 // pred_fallthru
      _
    // Predicated region
    $region14: #{tpu_custom_call.1} parent=1 // pred_check
      _
    $region15: #{tpu_custom_call.1} parent=1 // pred_check_branch
      %48 = sbr.rel (0) target = $region17
    $region16: #{tpu_custom_call.1} parent=1 // pred_region
      %s50 = ssub.s32 2048, 2048
      %51 = vsyncadd [#allocation6], %s50
      %s52 = sshll.u32 [#allocation5], 4
      %s53 = int_to_ptr.vmem [resolvable:$true] %s52
      %58 = dma.hbm_to_vmem [thread:$0]  %s3, 2048, %s53, [#allocation6], 128, 128, 8
    $region17: #{tpu_custom_call.1} parent=1 // pred_fallthru
      _
    // Predicated region
    $region18: #{tpu_custom_call.1} parent=1 // pred_check
      _
    $region19: #{tpu_custom_call.1} parent=1 // pred_check_branch
      %60 = sbr.rel (0) target = $region21
    $region20: #{tpu_custom_call.1} parent=1 // pred_region
      _
    $region21: #{tpu_custom_call.1} parent=1 // pred_fallthru
      _
    // Predicated region
    $region22: #{tpu_custom_call.1} parent=1 // pred_check
      _
    $region23: #{tpu_custom_call.1} parent=1 // pred_check_branch
      %62 = sbr.rel (0) target = $region25
    $region24: #{tpu_custom_call.1} parent=1 // pred_region
      %s64 = ssub.s32 2048, 2048
      %65 = vsyncadd [#allocation6], %s64
      %s66 = sshll.u32 [#allocation7], 4
      %s67 = int_to_ptr.vmem [resolvable:$true] %s66
      %72 = dma.hbm_to_vmem [thread:$0]  %s5, 2048, %s67, [#allocation6], 128, 128, 8
    $region25: #{tpu_custom_call.1} parent=1 // pred_fallthru
      _
    // Predicated region
    $region26: #{tpu_custom_call.1} parent=1 // pred_check
      _
    $region27: #{tpu_custom_call.1} parent=1 // pred_check_branch
      %74 = sbr.rel (0) target = $region29
    $region28: #{tpu_custom_call.1} parent=1 // pred_region
      _
    $region29: #{tpu_custom_call.1} parent=1 // pred_fallthru
      _
    // Predicated region
    $region30: #{tpu_custom_call.1} parent=1 // pred_check
      _
    $region31: #{tpu_custom_call.1} parent=1 // pred_check_branch
      %76 = sbr.rel (0) target = $region33
    $region32: #{tpu_custom_call.1} parent=1 // pred_region
      %s78 = ssub.s32 2048, 2048
      %79 = vsyncadd [#allocation9], %s78
      %s80 = sshll.u32 [#allocation8], 4
      %s81 = int_to_ptr.vmem [resolvable:$true] %s80
      %86 = dma.hbm_to_vmem [thread:$0]  %s7, 2048, %s81, [#allocation9], 128, 128, 8
    $region33: #{tpu_custom_call.1} parent=1 // pred_fallthru
      _
    // Predicated region
    $region34: #{tpu_custom_call.1} parent=1 // pred_check
      _
    $region35: #{tpu_custom_call.1} parent=1 // pred_check_branch
      %88 = sbr.rel (0) target = $region37
    $region36: #{tpu_custom_call.1} parent=1 // pred_region
      _
    $region37: #{tpu_custom_call.1} parent=1 // pred_fallthru
      _
    // Predicated region
    $region38: #{tpu_custom_call.1} parent=1 // pred_check
      _
    $region39: #{tpu_custom_call.1} parent=1 // pred_check_branch
      %90 = sbr.rel (0) target = $region41
    $region40: #{tpu_custom_call.1} parent=1 // pred_region
      %s92 = ssub.s32 2048, 2048
      %93 = vsyncadd [#allocation9], %s92
      %s94 = sshll.u32 [#allocation10], 4
      %s95 = int_to_ptr.vmem [resolvable:$true] %s94
      %100 = dma.hbm_to_vmem [thread:$0]  %s9, 2048, %s95, [#allocation9], 128, 128, 8
    $region41: #{tpu_custom_call.1} parent=1 // pred_fallthru
      _
    // Predicated region
    $region42: #{tpu_custom_call.1} parent=1 // pred_check
      _
    $region43: #{tpu_custom_call.1} parent=1 // pred_check_branch
      %102 = sbr.rel (0) target = $region45
    $region44: #{tpu_custom_call.1} parent=1 // pred_region
      _
    $region45: #{tpu_custom_call.1} parent=1 // pred_fallthru
      _
    // Predicated region
    $region46: #{tpu_custom_call.1} parent=1 // pred_check
      _
    $region47: #{tpu_custom_call.1} parent=1 // pred_check_branch
      %104 = sbr.rel (0) target = $region49
    $region48: #{tpu_custom_call.1} parent=1 // pred_region
      %s106 = ssub.s32 2048, 2048
      %107 = vsyncadd [#allocation12], %s106
      %s108 = sshll.u32 [#allocation11], 4
      %s109 = int_to_ptr.vmem [resolvable:$true] %s108
      %114 = dma.hbm_to_vmem [thread:$0]  %s11, 2048, %s109, [#allocation12], 128, 128, 8
    $region49: #{tpu_custom_call.1} parent=1 // pred_fallthru
      _
    // Predicated region
    $region50: #{tpu_custom_call.1} parent=1 // pred_check
      _
    $region51: #{tpu_custom_call.1} parent=1 // pred_check_branch
      %116 = sbr.rel (0) target = $region53
    $region52: #{tpu_custom_call.1} parent=1 // pred_region
      _
    $region53: #{tpu_custom_call.1} parent=1 // pred_fallthru
      _
    // Predicated region
    $region54: #{tpu_custom_call.1} parent=1 // pred_check
      _
    $region55: #{tpu_custom_call.1} parent=1 // pred_check_branch
      %118 = sbr.rel (0) target = $region57
    $region56: #{tpu_custom_call.1} parent=1 // pred_region
      %s120 = ssub.s32 2048, 2048
      %121 = vsyncadd [#allocation12], %s120
      %s122 = sshll.u32 [#allocation13], 4
      %s123 = int_to_ptr.vmem [resolvable:$true] %s122
      %128 = dma.hbm_to_vmem [thread:$0]  %s13, 2048, %s123, [#allocation12], 128, 128, 8
    $region57: #{tpu_custom_call.1} parent=1 // pred_fallthru
      _
    // Predicated region
    $region58: #{tpu_custom_call.1} parent=1 // pred_check
      _
    $region59: #{tpu_custom_call.1} parent=1 // pred_check_branch
      %130 = sbr.rel (0) target = $region61
    $region60: #{tpu_custom_call.1} parent=1 // pred_region
      _
    $region61: #{tpu_custom_call.1} parent=1 // pred_fallthru
      _
    // Predicated region
    $region62: #{tpu_custom_call.1} parent=1 // pred_check
      _
    $region63: #{tpu_custom_call.1} parent=1 // pred_check_branch
      %132 = sbr.rel (0) target = $region65
    $region64: #{tpu_custom_call.1} parent=1 // pred_region
      %s134 = ssub.s32 2048, 2048
      %135 = vsyncadd [#allocation15], %s134
      %s136 = sshll.u32 [#allocation14], 4
      %s137 = int_to_ptr.vmem [resolvable:$true] %s136
      %142 = dma.hbm_to_vmem [thread:$0]  %s15, 2048, %s137, [#allocation15], 128, 128, 8
    $region65: #{tpu_custom_call.1} parent=1 // pred_fallthru
      _
    // Predicated region
    $region66: #{tpu_custom_call.1} parent=1 // pred_check
      _
    $region67: #{tpu_custom_call.1} parent=1 // pred_check_branch
      %144 = sbr.rel (0) target = $region69
    $region68: #{tpu_custom_call.1} parent=1 // pred_region
      _
    $region69: #{tpu_custom_call.1} parent=1 // pred_fallthru
      _
    // Predicated region
    $region70: #{tpu_custom_call.1} parent=1 // pred_check
      _
    $region71: #{tpu_custom_call.1} parent=1 // pred_check_branch
      %146 = sbr.rel (0) target = $region73
    $region72: #{tpu_custom_call.1} parent=1 // pred_region
      %s148 = ssub.s32 2048, 2048
      %149 = vsyncadd [#allocation15], %s148
      %s150 = sshll.u32 [#allocation16], 4
      %s151 = int_to_ptr.vmem [resolvable:$true] %s150
      %156 = dma.hbm_to_vmem [thread:$0]  %s17, 2048, %s151, [#allocation15], 128, 128, 8
    $region73: #{tpu_custom_call.1} parent=1 // pred_fallthru
      _
    // Predicated region
    $region74: #{tpu_custom_call.1} parent=1 // pred_check
      _
    $region75: #{tpu_custom_call.1} parent=1 // pred_check_branch
      %158 = sbr.rel (0) target = $region77
    $region76: #{tpu_custom_call.1} parent=1 // pred_region
      _
    $region77: #{tpu_custom_call.1} parent=1 // pred_fallthru
      _
    // Predicated region
    $region78: #{tpu_custom_call.1} parent=1 // pred_check
      _
    $region79: #{tpu_custom_call.1} parent=1 // pred_check_branch
      %160 = sbr.rel (0) target = $region81
    $region80: #{tpu_custom_call.1} parent=1 // pred_region
      %161 = dma.done [#allocation3], 128
    $region81: #{tpu_custom_call.1} parent=1 // pred_fallthru
      _
    // Predicated region
    $region82: #{tpu_custom_call.1} parent=1 // pred_check
      _
    $region83: #{tpu_custom_call.1} parent=1 // pred_check_branch
      %163 = sbr.rel (0) target = $region85
    $region84: #{tpu_custom_call.1} parent=1 // pred_region
      %164 = dma.done [#allocation6], 2048
    $region85: #{tpu_custom_call.1} parent=1 // pred_fallthru
      _
    // Predicated region
    $region86: #{tpu_custom_call.1} parent=1 // pred_check
      _
    $region87: #{tpu_custom_call.1} parent=1 // pred_check_branch
      %166 = sbr.rel (0) target = $region89
    $region88: #{tpu_custom_call.1} parent=1 // pred_region
      %167 = dma.done [#allocation6], 2048
    $region89: #{tpu_custom_call.1} parent=1 // pred_fallthru
      _
    // Predicated region
    $region90: #{tpu_custom_call.1} parent=1 // pred_check
      _
    $region91: #{tpu_custom_call.1} parent=1 // pred_check_branch
      %169 = sbr.rel (0) target = $region93
    $region92: #{tpu_custom_call.1} parent=1 // pred_region
      %170 = dma.done [#allocation9], 2048
    $region93: #{tpu_custom_call.1} parent=1 // pred_fallthru
      _
    // Predicated region
    $region94: #{tpu_custom_call.1} parent=1 // pred_check
      _
    $region95: #{tpu_custom_call.1} parent=1 // pred_check_branch
      %172 = sbr.rel (0) target = $region97
    $region96: #{tpu_custom_call.1} parent=1 // pred_region
      %173 = dma.done [#allocation9], 2048
    $region97: #{tpu_custom_call.1} parent=1 // pred_fallthru
      _
    // Predicated region
    $region98: #{tpu_custom_call.1} parent=1 // pred_check
      _
    $region99: #{tpu_custom_call.1} parent=1 // pred_check_branch
      %175 = sbr.rel (0) target = $region101
    $region100: #{tpu_custom_call.1} parent=1 // pred_region
      %176 = dma.done [#allocation12], 2048
    $region101: #{tpu_custom_call.1} parent=1 // pred_fallthru
      _
    // Predicated region
    $region102: #{tpu_custom_call.1} parent=1 // pred_check
      _
    $region103: #{tpu_custom_call.1} parent=1 // pred_check_branch
      %178 = sbr.rel (0) target = $region105
    $region104: #{tpu_custom_call.1} parent=1 // pred_region
      %179 = dma.done [#allocation12], 2048
    $region105: #{tpu_custom_call.1} parent=1 // pred_fallthru
      _
    // Predicated region
    $region106: #{tpu_custom_call.1} parent=1 // pred_check
      _
    $region107: #{tpu_custom_call.1} parent=1 // pred_check_branch
      %181 = sbr.rel (0) target = $region109
    $region108: #{tpu_custom_call.1} parent=1 // pred_region
      %182 = dma.done [#allocation15], 2048
    $region109: #{tpu_custom_call.1} parent=1 // pred_fallthru
      _
    // Predicated region
    $region110: #{tpu_custom_call.1} parent=1 // pred_check
      _
    $region111: #{tpu_custom_call.1} parent=1 // pred_check_branch
      %184 = sbr.rel (0) target = $region113
    $region112: #{tpu_custom_call.1} parent=1 // pred_region
      %185 = dma.done [#allocation15], 2048
    $region113: #{tpu_custom_call.1} parent=1 // pred_fallthru
      _
    %v186 = vld [vmem:[#allocation2] sm:$0xff]
    %v187 = vld [vmem:[%s1] sm:$0x1]
    %v188 = vld [vmem:[%s2] sm:$0x1]
    %v190 = vlaneseq
    %v191 = vshrl.u32 %v190, 7
    %v192 = vsub.s32 0, %v191
    %v193 = vrot.slane %v187, %v192
    %v195 = vmul.f32 %v186, %v193
    %v196 = vld [vmem:[#allocation5] sm:$0xff]
    %v197 = vld [vmem:[#allocation5 + $0x8] sm:$0xff]
    %v198 = vld [vmem:[#allocation5 + $0x10] sm:$0xff]
    %v199 = vld [vmem:[#allocation5 + $0x18] sm:$0xff]
    %v200 = vld [vmem:[#allocation5 + $0x20] sm:$0xff]
    %v201 = vld [vmem:[#allocation5 + $0x28] sm:$0xff]
    %v202 = vld [vmem:[#allocation5 + $0x30] sm:$0xff]
    %v203 = vld [vmem:[#allocation5 + $0x38] sm:$0xff]
    %v204 = vld [vmem:[#allocation5 + $0x40] sm:$0xff]
    %v205 = vld [vmem:[#allocation5 + $0x48] sm:$0xff]
    %v206 = vld [vmem:[#allocation5 + $0x50] sm:$0xff]
    %v207 = vld [vmem:[#allocation5 + $0x58] sm:$0xff]
    %v208 = vld [vmem:[#allocation5 + $0x60] sm:$0xff]
    %v209 = vld [vmem:[#allocation5 + $0x68] sm:$0xff]
    %v210 = vld [vmem:[#allocation5 + $0x70] sm:$0xff]
    %v211 = vld [vmem:[#allocation5 + $0x78] sm:$0xff]
    %v212 = vld [vmem:[%s4] sm:$0x1]
    %v214 = vlaneseq
    %v215 = vshrl.u32 %v214, 7
    %v216 = vsub.s32 0, %v215
    %v217 = vrot.slane %v212, %v216
    %219 = vmatprep.subr.mxu0 0.0
    %220 = vmatpush1.msra.mxu0 %v211
    %221 = vmatprep.subr.mxu0 0.0
    %222 = vmatpush1.msra.mxu0 %v210
    %223 = vmatprep.subr.mxu0 0.0
    %224 = vmatpush1.msra.mxu0 %v209
    %225 = vmatprep.subr.mxu0 0.0
    %226 = vmatpush1.msra.mxu0 %v208
    %227 = vmatprep.subr.mxu0 0.0
    %228 = vmatpush1.msra.mxu0 %v207
    %229 = vmatprep.subr.mxu0 0.0
    %230 = vmatpush1.msra.mxu0 %v206
    %231 = vmatprep.subr.mxu0 0.0
    %232 = vmatpush1.msra.mxu0 %v205
    %233 = vmatprep.subr.mxu0 0.0
    %234 = vmatpush1.msra.mxu0 %v204
    %235 = vmatprep.subr.mxu0 0.0
    %236 = vmatpush1.msra.mxu0 %v203
    %237 = vmatprep.subr.mxu0 0.0
    %238 = vmatpush1.msra.mxu0 %v202
    %239 = vmatprep.subr.mxu0 0.0
    %240 = vmatpush1.msra.mxu0 %v201
    %241 = vmatprep.subr.mxu0 0.0
    %242 = vmatpush1.msra.mxu0 %v200
    %243 = vmatprep.subr.mxu0 0.0
    %244 = vmatpush1.msra.mxu0 %v199
    %245 = vmatprep.subr.mxu0 0.0
    %246 = vmatpush1.msra.mxu0 %v198
    %247 = vmatprep.subr.mxu0 0.0
    %248 = vmatpush1.msra.mxu0 %v197
    %249 = vmatprep.subr.mxu0 0.0
    %250 = vmatpush1.msra.mxu0 %v196
    %251 = vmatprep.subr.mxu0 0.0
    %252 = vmatpush2.msra.mxu0 0.0
    %253 = vmatprep.subr.mxu0 0.0
    %254 = vmatpush2.msra.mxu0 0.0
    %255 = vmatprep.subr.mxu0 0.0
    %256 = vmatpush2.msra.mxu0 0.0
    %257 = vmatprep.subr.mxu0 0.0
    %258 = vmatpush2.msra.mxu0 0.0
    %259 = vmatprep.subr.mxu0 0.0
    %260 = vmatpush2.msra.mxu0 0.0
    %261 = vmatprep.subr.mxu0 0.0
    %262 = vmatpush2.msra.mxu0 0.0
    %263 = vmatprep.subr.mxu0 0.0
    %264 = vmatpush2.msra.mxu0 0.0
    %265 = vmatprep.subr.mxu0 0.0
    %266 = vmatpush2.msra.mxu0 0.0
    %267 = vmatprep.subr.mxu0 0.0
    %268 = vmatpush2.msra.mxu0 0.0
    %269 = vmatprep.subr.mxu0 0.0
    %270 = vmatpush2.msra.mxu0 0.0
    %271 = vmatprep.subr.mxu0 0.0
    %272 = vmatpush2.msra.mxu0 0.0
    %273 = vmatprep.subr.mxu0 0.0
    %274 = vmatpush2.msra.mxu0 0.0
    %275 = vmatprep.subr.mxu0 0.0
    %276 = vmatpush2.msra.mxu0 0.0
    %277 = vmatprep.subr.mxu0 0.0
    %278 = vmatpush2.msra.mxu0 0.0
    %279 = vmatprep.subr.mxu0 0.0
    %280 = vmatpush2.msra.mxu0 0.0
    %281 = vmatprep.subr.mxu0 0.0
    %282 = vmatpush2.msra.mxu0 0.0
    %283 = vmatprep.mubr.f32.mxu0 0.0
    %284 = vmatmul.mubr.f32.gmra.mxu0 %v195
    %v285 = vpop.f32.mrf.mxu0
    %v286 = vadd.f32 %v217, %v285
    %v287 = vpop.f32.mrf.mxu0
    %288 = vdwg.mxu0
    %v289 = vtanh.pop %v286
    %v290 = vld [vmem:[#allocation7] sm:$0xff]
    %v291 = vld [vmem:[#allocation7 + $0x8] sm:$0xff]
    %v292 = vld [vmem:[#allocation7 + $0x10] sm:$0xff]
    %v293 = vld [vmem:[#allocation7 + $0x18] sm:$0xff]
    %v294 = vld [vmem:[#allocation7 + $0x20] sm:$0xff]
    %v295 = vld [vmem:[#allocation7 + $0x28] sm:$0xff]
    %v296 = vld [vmem:[#allocation7 + $0x30] sm:$0xff]
    %v297 = vld [vmem:[#allocation7 + $0x38] sm:$0xff]
    %v298 = vld [vmem:[#allocation7 + $0x40] sm:$0xff]
    %v299 = vld [vmem:[#allocation7 + $0x48] sm:$0xff]
    %v300 = vld [vmem:[#allocation7 + $0x50] sm:$0xff]
    %v301 = vld [vmem:[#allocation7 + $0x58] sm:$0xff]
    %v302 = vld [vmem:[#allocation7 + $0x60] sm:$0xff]
    %v303 = vld [vmem:[#allocation7 + $0x68] sm:$0xff]
    %v304 = vld [vmem:[#allocation7 + $0x70] sm:$0xff]
    %v305 = vld [vmem:[#allocation7 + $0x78] sm:$0xff]
    %v306 = vld [vmem:[%s6] sm:$0x1]
    %v308 = vlaneseq
    %v309 = vshrl.u32 %v308, 7
    %v310 = vsub.s32 0, %v309
    %v311 = vrot.slane %v306, %v310
    %313 = vmatprep.subr.mxu0 0.0
    %314 = vmatpush1.msra.mxu0 %v305
    %315 = vmatprep.subr.mxu0 0.0
    %316 = vmatpush1.msra.mxu0 %v304
    %317 = vmatprep.subr.mxu0 0.0
    %318 = vmatpush1.msra.mxu0 %v303
    %319 = vmatprep.subr.mxu0 0.0
    %320 = vmatpush1.msra.mxu0 %v302
    %321 = vmatprep.subr.mxu0 0.0
    %322 = vmatpush1.msra.mxu0 %v301
    %323 = vmatprep.subr.mxu0 0.0
    %324 = vmatpush1.msra.mxu0 %v300
    %325 = vmatprep.subr.mxu0 0.0
    %326 = vmatpush1.msra.mxu0 %v299
    %327 = vmatprep.subr.mxu0 0.0
    %328 = vmatpush1.msra.mxu0 %v298
    %329 = vmatprep.subr.mxu0 0.0
    %330 = vmatpush1.msra.mxu0 %v297
    %331 = vmatprep.subr.mxu0 0.0
    %332 = vmatpush1.msra.mxu0 %v296
    %333 = vmatprep.subr.mxu0 0.0
    %334 = vmatpush1.msra.mxu0 %v295
    %335 = vmatprep.subr.mxu0 0.0
    %336 = vmatpush1.msra.mxu0 %v294
    %337 = vmatprep.subr.mxu0 0.0
    %338 = vmatpush1.msra.mxu0 %v293
    %339 = vmatprep.subr.mxu0 0.0
    %340 = vmatpush1.msra.mxu0 %v292
    %341 = vmatprep.subr.mxu0 0.0
    %342 = vmatpush1.msra.mxu0 %v291
    %343 = vmatprep.subr.mxu0 0.0
    %344 = vmatpush1.msra.mxu0 %v290
    %345 = vmatprep.subr.mxu0 0.0
    %346 = vmatpush2.msra.mxu0 0.0
    %347 = vmatprep.subr.mxu0 0.0
    %348 = vmatpush2.msra.mxu0 0.0
    %349 = vmatprep.subr.mxu0 0.0
    %350 = vmatpush2.msra.mxu0 0.0
    %351 = vmatprep.subr.mxu0 0.0
    %352 = vmatpush2.msra.mxu0 0.0
    %353 = vmatprep.subr.mxu0 0.0
    %354 = vmatpush2.msra.mxu0 0.0
    %355 = vmatprep.subr.mxu0 0.0
    %356 = vmatpush2.msra.mxu0 0.0
    %357 = vmatprep.subr.mxu0 0.0
    %358 = vmatpush2.msra.mxu0 0.0
    %359 = vmatprep.subr.mxu0 0.0
    %360 = vmatpush2.msra.mxu0 0.0
    %361 = vmatprep.subr.mxu0 0.0
    %362 = vmatpush2.msra.mxu0 0.0
    %363 = vmatprep.subr.mxu0 0.0
    %364 = vmatpush2.msra.mxu0 0.0
    %365 = vmatprep.subr.mxu0 0.0
    %366 = vmatpush2.msra.mxu0 0.0
    %367 = vmatprep.subr.mxu0 0.0
    %368 = vmatpush2.msra.mxu0 0.0
    %369 = vmatprep.subr.mxu0 0.0
    %370 = vmatpush2.msra.mxu0 0.0
    %371 = vmatprep.subr.mxu0 0.0
    %372 = vmatpush2.msra.mxu0 0.0
    %373 = vmatprep.subr.mxu0 0.0
    %374 = vmatpush2.msra.mxu0 0.0
    %375 = vmatprep.subr.mxu0 0.0
    %376 = vmatpush2.msra.mxu0 0.0
    %377 = vmatprep.mubr.f32.mxu0 0.0
    %378 = vmatmul.mubr.f32.gmra.mxu0 %v289
    %v379 = vpop.f32.mrf.mxu0
    %v380 = vadd.f32 %v311, %v379
    %v381 = vpop.f32.mrf.mxu0
    %382 = vdwg.mxu0
    %v383 = vtanh.pop %v380
    %v384 = vld [vmem:[#allocation8] sm:$0xff]
    %v385 = vld [vmem:[#allocation8 + $0x8] sm:$0xff]
    %v386 = vld [vmem:[#allocation8 + $0x10] sm:$0xff]
    %v387 = vld [vmem:[#allocation8 + $0x18] sm:$0xff]
    %v388 = vld [vmem:[#allocation8 + $0x20] sm:$0xff]
    %v389 = vld [vmem:[#allocation8 + $0x28] sm:$0xff]
    %v390 = vld [vmem:[#allocation8 + $0x30] sm:$0xff]
    %v391 = vld [vmem:[#allocation8 + $0x38] sm:$0xff]
    %v392 = vld [vmem:[#allocation8 + $0x40] sm:$0xff]
    %v393 = vld [vmem:[#allocation8 + $0x48] sm:$0xff]
    %v394 = vld [vmem:[#allocation8 + $0x50] sm:$0xff]
    %v395 = vld [vmem:[#allocation8 + $0x58] sm:$0xff]
    %v396 = vld [vmem:[#allocation8 + $0x60] sm:$0xff]
    %v397 = vld [vmem:[#allocation8 + $0x68] sm:$0xff]
    %v398 = vld [vmem:[#allocation8 + $0x70] sm:$0xff]
    %v399 = vld [vmem:[#allocation8 + $0x78] sm:$0xff]
    %v400 = vld [vmem:[%s8] sm:$0x1]
    %v402 = vlaneseq
    %v403 = vshrl.u32 %v402, 7
    %v404 = vsub.s32 0, %v403
    %v405 = vrot.slane %v400, %v404
    %407 = vmatprep.subr.mxu0 0.0
    %408 = vmatpush1.msra.mxu0 %v399
    %409 = vmatprep.subr.mxu0 0.0
    %410 = vmatpush1.msra.mxu0 %v398
    %411 = vmatprep.subr.mxu0 0.0
    %412 = vmatpush1.msra.mxu0 %v397
    %413 = vmatprep.subr.mxu0 0.0
    %414 = vmatpush1.msra.mxu0 %v396
    %415 = vmatprep.subr.mxu0 0.0
    %416 = vmatpush1.msra.mxu0 %v395
    %417 = vmatprep.subr.mxu0 0.0
    %418 = vmatpush1.msra.mxu0 %v394
    %419 = vmatprep.subr.mxu0 0.0
    %420 = vmatpush1.msra.mxu0 %v393
    %421 = vmatprep.subr.mxu0 0.0
    %422 = vmatpush1.msra.mxu0 %v392
    %423 = vmatprep.subr.mxu0 0.0
    %424 = vmatpush1.msra.mxu0 %v391
    %425 = vmatprep.subr.mxu0 0.0
    %426 = vmatpush1.msra.mxu0 %v390
    %427 = vmatprep.subr.mxu0 0.0
    %428 = vmatpush1.msra.mxu0 %v389
    %429 = vmatprep.subr.mxu0 0.0
    %430 = vmatpush1.msra.mxu0 %v388
    %431 = vmatprep.subr.mxu0 0.0
    %432 = vmatpush1.msra.mxu0 %v387
    %433 = vmatprep.subr.mxu0 0.0
    %434 = vmatpush1.msra.mxu0 %v386
    %435 = vmatprep.subr.mxu0 0.0
    %436 = vmatpush1.msra.mxu0 %v385
    %437 = vmatprep.subr.mxu0 0.0
    %438 = vmatpush1.msra.mxu0 %v384
    %439 = vmatprep.subr.mxu0 0.0
    %440 = vmatpush2.msra.mxu0 0.0
    %441 = vmatprep.subr.mxu0 0.0
    %442 = vmatpush2.msra.mxu0 0.0
    %443 = vmatprep.subr.mxu0 0.0
    %444 = vmatpush2.msra.mxu0 0.0
    %445 = vmatprep.subr.mxu0 0.0
    %446 = vmatpush2.msra.mxu0 0.0
    %447 = vmatprep.subr.mxu0 0.0
    %448 = vmatpush2.msra.mxu0 0.0
    %449 = vmatprep.subr.mxu0 0.0
    %450 = vmatpush2.msra.mxu0 0.0
    %451 = vmatprep.subr.mxu0 0.0
    %452 = vmatpush2.msra.mxu0 0.0
    %453 = vmatprep.subr.mxu0 0.0
    %454 = vmatpush2.msra.mxu0 0.0
    %455 = vmatprep.subr.mxu0 0.0
    %456 = vmatpush2.msra.mxu0 0.0
    %457 = vmatprep.subr.mxu0 0.0
    %458 = vmatpush2.msra.mxu0 0.0
    %459 = vmatprep.subr.mxu0 0.0
    %460 = vmatpush2.msra.mxu0 0.0
    %461 = vmatprep.subr.mxu0 0.0
    %462 = vmatpush2.msra.mxu0 0.0
    %463 = vmatprep.subr.mxu0 0.0
    %464 = vmatpush2.msra.mxu0 0.0
    %465 = vmatprep.subr.mxu0 0.0
    %466 = vmatpush2.msra.mxu0 0.0
    %467 = vmatprep.subr.mxu0 0.0
    %468 = vmatpush2.msra.mxu0 0.0
    %469 = vmatprep.subr.mxu0 0.0
    %470 = vmatpush2.msra.mxu0 0.0
    %471 = vmatprep.mubr.f32.mxu0 0.0
    %472 = vmatmul.mubr.f32.gmra.mxu0 %v383
    %v473 = vpop.f32.mrf.mxu0
    %v474 = vadd.f32 %v405, %v473
    %v475 = vpop.f32.mrf.mxu0
    %476 = vdwg.mxu0
    %v477 = vtanh.pop %v474
    %v478 = vld [vmem:[#allocation10] sm:$0xff]
    %v479 = vld [vmem:[#allocation10 + $0x8] sm:$0xff]
    %v480 = vld [vmem:[#allocation10 + $0x10] sm:$0xff]
    %v481 = vld [vmem:[#allocation10 + $0x18] sm:$0xff]
    %v482 = vld [vmem:[#allocation10 + $0x20] sm:$0xff]
    %v483 = vld [vmem:[#allocation10 + $0x28] sm:$0xff]
    %v484 = vld [vmem:[#allocation10 + $0x30] sm:$0xff]
    %v485 = vld [vmem:[#allocation10 + $0x38] sm:$0xff]
    %v486 = vld [vmem:[#allocation10 + $0x40] sm:$0xff]
    %v487 = vld [vmem:[#allocation10 + $0x48] sm:$0xff]
    %v488 = vld [vmem:[#allocation10 + $0x50] sm:$0xff]
    %v489 = vld [vmem:[#allocation10 + $0x58] sm:$0xff]
    %v490 = vld [vmem:[#allocation10 + $0x60] sm:$0xff]
    %v491 = vld [vmem:[#allocation10 + $0x68] sm:$0xff]
    %v492 = vld [vmem:[#allocation10 + $0x70] sm:$0xff]
    %v493 = vld [vmem:[#allocation10 + $0x78] sm:$0xff]
    %v494 = vld [vmem:[%s10] sm:$0x1]
    %v496 = vlaneseq
    %v497 = vshrl.u32 %v496, 7
    %v498 = vsub.s32 0, %v497
    %v499 = vrot.slane %v494, %v498
    %501 = vmatprep.subr.mxu0 0.0
    %502 = vmatpush1.msra.mxu0 %v493
    %503 = vmatprep.subr.mxu0 0.0
    %504 = vmatpush1.msra.mxu0 %v492
    %505 = vmatprep.subr.mxu0 0.0
    %506 = vmatpush1.msra.mxu0 %v491
    %507 = vmatprep.subr.mxu0 0.0
    %508 = vmatpush1.msra.mxu0 %v490
    %509 = vmatprep.subr.mxu0 0.0
    %510 = vmatpush1.msra.mxu0 %v489
    %511 = vmatprep.subr.mxu0 0.0
    %512 = vmatpush1.msra.mxu0 %v488
    %513 = vmatprep.subr.mxu0 0.0
    %514 = vmatpush1.msra.mxu0 %v487
    %515 = vmatprep.subr.mxu0 0.0
    %516 = vmatpush1.msra.mxu0 %v486
    %517 = vmatprep.subr.mxu0 0.0
    %518 = vmatpush1.msra.mxu0 %v485
    %519 = vmatprep.subr.mxu0 0.0
    %520 = vmatpush1.msra.mxu0 %v484
    %521 = vmatprep.subr.mxu0 0.0
    %522 = vmatpush1.msra.mxu0 %v483
    %523 = vmatprep.subr.mxu0 0.0
    %524 = vmatpush1.msra.mxu0 %v482
    %525 = vmatprep.subr.mxu0 0.0
    %526 = vmatpush1.msra.mxu0 %v481
    %527 = vmatprep.subr.mxu0 0.0
    %528 = vmatpush1.msra.mxu0 %v480
    %529 = vmatprep.subr.mxu0 0.0
    %530 = vmatpush1.msra.mxu0 %v479
    %531 = vmatprep.subr.mxu0 0.0
    %532 = vmatpush1.msra.mxu0 %v478
    %533 = vmatprep.subr.mxu0 0.0
    %534 = vmatpush2.msra.mxu0 0.0
    %535 = vmatprep.subr.mxu0 0.0
    %536 = vmatpush2.msra.mxu0 0.0
    %537 = vmatprep.subr.mxu0 0.0
    %538 = vmatpush2.msra.mxu0 0.0
    %539 = vmatprep.subr.mxu0 0.0
    %540 = vmatpush2.msra.mxu0 0.0
    %541 = vmatprep.subr.mxu0 0.0
    %542 = vmatpush2.msra.mxu0 0.0
    %543 = vmatprep.subr.mxu0 0.0
    %544 = vmatpush2.msra.mxu0 0.0
    %545 = vmatprep.subr.mxu0 0.0
    %546 = vmatpush2.msra.mxu0 0.0
    %547 = vmatprep.subr.mxu0 0.0
    %548 = vmatpush2.msra.mxu0 0.0
    %549 = vmatprep.subr.mxu0 0.0
    %550 = vmatpush2.msra.mxu0 0.0
    %551 = vmatprep.subr.mxu0 0.0
    %552 = vmatpush2.msra.mxu0 0.0
    %553 = vmatprep.subr.mxu0 0.0
    %554 = vmatpush2.msra.mxu0 0.0
    %555 = vmatprep.subr.mxu0 0.0
    %556 = vmatpush2.msra.mxu0 0.0
    %557 = vmatprep.subr.mxu0 0.0
    %558 = vmatpush2.msra.mxu0 0.0
    %559 = vmatprep.subr.mxu0 0.0
    %560 = vmatpush2.msra.mxu0 0.0
    %561 = vmatprep.subr.mxu0 0.0
    %562 = vmatpush2.msra.mxu0 0.0
    %563 = vmatprep.subr.mxu0 0.0
    %564 = vmatpush2.msra.mxu0 0.0
    %565 = vmatprep.mubr.f32.mxu0 0.0
    %566 = vmatmul.mubr.f32.gmra.mxu0 %v477
    %v567 = vpop.f32.mrf.mxu0
    %v568 = vadd.f32 %v499, %v567
    %v569 = vpop.f32.mrf.mxu0
    %570 = vdwg.mxu0
    %v571 = vld [vmem:[#allocation11] sm:$0xff]
    %v572 = vld [vmem:[#allocation11 + $0x8] sm:$0xff]
    %v573 = vld [vmem:[#allocation11 + $0x10] sm:$0xff]
    %v574 = vld [vmem:[#allocation11 + $0x18] sm:$0xff]
    %v575 = vld [vmem:[#allocation11 + $0x20] sm:$0xff]
    %v576 = vld [vmem:[#allocation11 + $0x28] sm:$0xff]
    %v577 = vld [vmem:[#allocation11 + $0x30] sm:$0xff]
    %v578 = vld [vmem:[#allocation11 + $0x38] sm:$0xff]
    %v579 = vld [vmem:[#allocation11 + $0x40] sm:$0xff]
    %v580 = vld [vmem:[#allocation11 + $0x48] sm:$0xff]
    %v581 = vld [vmem:[#allocation11 + $0x50] sm:$0xff]
    %v582 = vld [vmem:[#allocation11 + $0x58] sm:$0xff]
    %v583 = vld [vmem:[#allocation11 + $0x60] sm:$0xff]
    %v584 = vld [vmem:[#allocation11 + $0x68] sm:$0xff]
    %v585 = vld [vmem:[#allocation11 + $0x70] sm:$0xff]
    %v586 = vld [vmem:[#allocation11 + $0x78] sm:$0xff]
    %v587 = vld [vmem:[%s12] sm:$0x1]
    %v589 = vlaneseq
    %v590 = vshrl.u32 %v589, 7
    %v591 = vsub.s32 0, %v590
    %v592 = vrot.slane %v587, %v591
    %594 = vmatprep.subr.mxu0 0.0
    %595 = vmatpush1.msra.mxu0 %v586
    %596 = vmatprep.subr.mxu0 0.0
    %597 = vmatpush1.msra.mxu0 %v585
    %598 = vmatprep.subr.mxu0 0.0
    %599 = vmatpush1.msra.mxu0 %v584
    %600 = vmatprep.subr.mxu0 0.0
    %601 = vmatpush1.msra.mxu0 %v583
    %602 = vmatprep.subr.mxu0 0.0
    %603 = vmatpush1.msra.mxu0 %v582
    %604 = vmatprep.subr.mxu0 0.0
    %605 = vmatpush1.msra.mxu0 %v581
    %606 = vmatprep.subr.mxu0 0.0
    %607 = vmatpush1.msra.mxu0 %v580
    %608 = vmatprep.subr.mxu0 0.0
    %609 = vmatpush1.msra.mxu0 %v579
    %610 = vmatprep.subr.mxu0 0.0
    %611 = vmatpush1.msra.mxu0 %v578
    %612 = vmatprep.subr.mxu0 0.0
    %613 = vmatpush1.msra.mxu0 %v577
    %614 = vmatprep.subr.mxu0 0.0
    %615 = vmatpush1.msra.mxu0 %v576
    %616 = vmatprep.subr.mxu0 0.0
    %617 = vmatpush1.msra.mxu0 %v575
    %618 = vmatprep.subr.mxu0 0.0
    %619 = vmatpush1.msra.mxu0 %v574
    %620 = vmatprep.subr.mxu0 0.0
    %621 = vmatpush1.msra.mxu0 %v573
    %622 = vmatprep.subr.mxu0 0.0
    %623 = vmatpush1.msra.mxu0 %v572
    %624 = vmatprep.subr.mxu0 0.0
    %625 = vmatpush1.msra.mxu0 %v571
    %626 = vmatprep.subr.mxu0 0.0
    %627 = vmatpush2.msra.mxu0 0.0
    %628 = vmatprep.subr.mxu0 0.0
    %629 = vmatpush2.msra.mxu0 0.0
    %630 = vmatprep.subr.mxu0 0.0
    %631 = vmatpush2.msra.mxu0 0.0
    %632 = vmatprep.subr.mxu0 0.0
    %633 = vmatpush2.msra.mxu0 0.0
    %634 = vmatprep.subr.mxu0 0.0
    %635 = vmatpush2.msra.mxu0 0.0
    %636 = vmatprep.subr.mxu0 0.0
    %637 = vmatpush2.msra.mxu0 0.0
    %638 = vmatprep.subr.mxu0 0.0
    %639 = vmatpush2.msra.mxu0 0.0
    %640 = vmatprep.subr.mxu0 0.0
    %641 = vmatpush2.msra.mxu0 0.0
    %642 = vmatprep.subr.mxu0 0.0
    %643 = vmatpush2.msra.mxu0 0.0
    %644 = vmatprep.subr.mxu0 0.0
    %645 = vmatpush2.msra.mxu0 0.0
    %646 = vmatprep.subr.mxu0 0.0
    %647 = vmatpush2.msra.mxu0 0.0
    %648 = vmatprep.subr.mxu0 0.0
    %649 = vmatpush2.msra.mxu0 0.0
    %650 = vmatprep.subr.mxu0 0.0
    %651 = vmatpush2.msra.mxu0 0.0
    %652 = vmatprep.subr.mxu0 0.0
    %653 = vmatpush2.msra.mxu0 0.0
    %654 = vmatprep.subr.mxu0 0.0
    %655 = vmatpush2.msra.mxu0 0.0
    %656 = vmatprep.subr.mxu0 0.0
    %657 = vmatpush2.msra.mxu0 0.0
    %658 = vmatprep.mubr.f32.mxu0 0.0
    %659 = vmatmul.mubr.f32.gmra.mxu0 %v195
    %v660 = vpop.f32.mrf.mxu0
    %v661 = vadd.f32 %v592, %v660
    %v662 = vpop.f32.mrf.mxu0
    %663 = vdwg.mxu0
    %v664 = vmax.f32 %v661, 0.0
    %v665 = vld [vmem:[#allocation13] sm:$0xff]
    %v666 = vld [vmem:[#allocation13 + $0x8] sm:$0xff]
    %v667 = vld [vmem:[#allocation13 + $0x10] sm:$0xff]
    %v668 = vld [vmem:[#allocation13 + $0x18] sm:$0xff]
    %v669 = vld [vmem:[#allocation13 + $0x20] sm:$0xff]
    %v670 = vld [vmem:[#allocation13 + $0x28] sm:$0xff]
    %v671 = vld [vmem:[#allocation13 + $0x30] sm:$0xff]
    %v672 = vld [vmem:[#allocation13 + $0x38] sm:$0xff]
    %v673 = vld [vmem:[#allocation13 + $0x40] sm:$0xff]
    %v674 = vld [vmem:[#allocation13 + $0x48] sm:$0xff]
    %v675 = vld [vmem:[#allocation13 + $0x50] sm:$0xff]
    %v676 = vld [vmem:[#allocation13 + $0x58] sm:$0xff]
    %v677 = vld [vmem:[#allocation13 + $0x60] sm:$0xff]
    %v678 = vld [vmem:[#allocation13 + $0x68] sm:$0xff]
    %v679 = vld [vmem:[#allocation13 + $0x70] sm:$0xff]
    %v680 = vld [vmem:[#allocation13 + $0x78] sm:$0xff]
    %v681 = vld [vmem:[%s14] sm:$0x1]
    %v683 = vlaneseq
    %v684 = vshrl.u32 %v683, 7
    %v685 = vsub.s32 0, %v684
    %v686 = vrot.slane %v681, %v685
    %688 = vmatprep.subr.mxu0 0.0
    %689 = vmatpush1.msra.mxu0 %v680
    %690 = vmatprep.subr.mxu0 0.0
    %691 = vmatpush1.msra.mxu0 %v679
    %692 = vmatprep.subr.mxu0 0.0
    %693 = vmatpush1.msra.mxu0 %v678
    %694 = vmatprep.subr.mxu0 0.0
    %695 = vmatpush1.msra.mxu0 %v677
    %696 = vmatprep.subr.mxu0 0.0
    %697 = vmatpush1.msra.mxu0 %v676
    %698 = vmatprep.subr.mxu0 0.0
    %699 = vmatpush1.msra.mxu0 %v675
    %700 = vmatprep.subr.mxu0 0.0
    %701 = vmatpush1.msra.mxu0 %v674
    %702 = vmatprep.subr.mxu0 0.0
    %703 = vmatpush1.msra.mxu0 %v673
    %704 = vmatprep.subr.mxu0 0.0
    %705 = vmatpush1.msra.mxu0 %v672
    %706 = vmatprep.subr.mxu0 0.0
    %707 = vmatpush1.msra.mxu0 %v671
    %708 = vmatprep.subr.mxu0 0.0
    %709 = vmatpush1.msra.mxu0 %v670
    %710 = vmatprep.subr.mxu0 0.0
    %711 = vmatpush1.msra.mxu0 %v669
    %712 = vmatprep.subr.mxu0 0.0
    %713 = vmatpush1.msra.mxu0 %v668
    %714 = vmatprep.subr.mxu0 0.0
    %715 = vmatpush1.msra.mxu0 %v667
    %716 = vmatprep.subr.mxu0 0.0
    %717 = vmatpush1.msra.mxu0 %v666
    %718 = vmatprep.subr.mxu0 0.0
    %719 = vmatpush1.msra.mxu0 %v665
    %720 = vmatprep.subr.mxu0 0.0
    %721 = vmatpush2.msra.mxu0 0.0
    %722 = vmatprep.subr.mxu0 0.0
    %723 = vmatpush2.msra.mxu0 0.0
    %724 = vmatprep.subr.mxu0 0.0
    %725 = vmatpush2.msra.mxu0 0.0
    %726 = vmatprep.subr.mxu0 0.0
    %727 = vmatpush2.msra.mxu0 0.0
    %728 = vmatprep.subr.mxu0 0.0
    %729 = vmatpush2.msra.mxu0 0.0
    %730 = vmatprep.subr.mxu0 0.0
    %731 = vmatpush2.msra.mxu0 0.0
    %732 = vmatprep.subr.mxu0 0.0
    %733 = vmatpush2.msra.mxu0 0.0
    %734 = vmatprep.subr.mxu0 0.0
    %735 = vmatpush2.msra.mxu0 0.0
    %736 = vmatprep.subr.mxu0 0.0
    %737 = vmatpush2.msra.mxu0 0.0
    %738 = vmatprep.subr.mxu0 0.0
    %739 = vmatpush2.msra.mxu0 0.0
    %740 = vmatprep.subr.mxu0 0.0
    %741 = vmatpush2.msra.mxu0 0.0
    %742 = vmatprep.subr.mxu0 0.0
    %743 = vmatpush2.msra.mxu0 0.0
    %744 = vmatprep.subr.mxu0 0.0
    %745 = vmatpush2.msra.mxu0 0.0
    %746 = vmatprep.subr.mxu0 0.0
    %747 = vmatpush2.msra.mxu0 0.0
    %748 = vmatprep.subr.mxu0 0.0
    %749 = vmatpush2.msra.mxu0 0.0
    %750 = vmatprep.subr.mxu0 0.0
    %751 = vmatpush2.msra.mxu0 0.0
    %752 = vmatprep.mubr.f32.mxu0 0.0
    %753 = vmatmul.mubr.f32.gmra.mxu0 %v664
    %v754 = vpop.f32.mrf.mxu0
    %v755 = vadd.f32 %v686, %v754
    %v756 = vpop.f32.mrf.mxu0
    %757 = vdwg.mxu0
    %v758 = vmax.f32 %v755, 0.0
    %v759 = vld [vmem:[#allocation14] sm:$0xff]
    %v760 = vld [vmem:[#allocation14 + $0x8] sm:$0xff]
    %v761 = vld [vmem:[#allocation14 + $0x10] sm:$0xff]
    %v762 = vld [vmem:[#allocation14 + $0x18] sm:$0xff]
    %v763 = vld [vmem:[#allocation14 + $0x20] sm:$0xff]
    %v764 = vld [vmem:[#allocation14 + $0x28] sm:$0xff]
    %v765 = vld [vmem:[#allocation14 + $0x30] sm:$0xff]
    %v766 = vld [vmem:[#allocation14 + $0x38] sm:$0xff]
    %v767 = vld [vmem:[#allocation14 + $0x40] sm:$0xff]
    %v768 = vld [vmem:[#allocation14 + $0x48] sm:$0xff]
    %v769 = vld [vmem:[#allocation14 + $0x50] sm:$0xff]
    %v770 = vld [vmem:[#allocation14 + $0x58] sm:$0xff]
    %v771 = vld [vmem:[#allocation14 + $0x60] sm:$0xff]
    %v772 = vld [vmem:[#allocation14 + $0x68] sm:$0xff]
    %v773 = vld [vmem:[#allocation14 + $0x70] sm:$0xff]
    %v774 = vld [vmem:[#allocation14 + $0x78] sm:$0xff]
    %v775 = vld [vmem:[%s16] sm:$0x1]
    %v777 = vlaneseq
    %v778 = vshrl.u32 %v777, 7
    %v779 = vsub.s32 0, %v778
    %v780 = vrot.slane %v775, %v779
    %782 = vmatprep.subr.mxu0 0.0
    %783 = vmatpush1.msra.mxu0 %v774
    %784 = vmatprep.subr.mxu0 0.0
    %785 = vmatpush1.msra.mxu0 %v773
    %786 = vmatprep.subr.mxu0 0.0
    %787 = vmatpush1.msra.mxu0 %v772
    %788 = vmatprep.subr.mxu0 0.0
    %789 = vmatpush1.msra.mxu0 %v771
    %790 = vmatprep.subr.mxu0 0.0
    %791 = vmatpush1.msra.mxu0 %v770
    %792 = vmatprep.subr.mxu0 0.0
    %793 = vmatpush1.msra.mxu0 %v769
    %794 = vmatprep.subr.mxu0 0.0
    %795 = vmatpush1.msra.mxu0 %v768
    %796 = vmatprep.subr.mxu0 0.0
    %797 = vmatpush1.msra.mxu0 %v767
    %798 = vmatprep.subr.mxu0 0.0
    %799 = vmatpush1.msra.mxu0 %v766
    %800 = vmatprep.subr.mxu0 0.0
    %801 = vmatpush1.msra.mxu0 %v765
    %802 = vmatprep.subr.mxu0 0.0
    %803 = vmatpush1.msra.mxu0 %v764
    %804 = vmatprep.subr.mxu0 0.0
    %805 = vmatpush1.msra.mxu0 %v763
    %806 = vmatprep.subr.mxu0 0.0
    %807 = vmatpush1.msra.mxu0 %v762
    %808 = vmatprep.subr.mxu0 0.0
    %809 = vmatpush1.msra.mxu0 %v761
    %810 = vmatprep.subr.mxu0 0.0
    %811 = vmatpush1.msra.mxu0 %v760
    %812 = vmatprep.subr.mxu0 0.0
    %813 = vmatpush1.msra.mxu0 %v759
    %814 = vmatprep.subr.mxu0 0.0
    %815 = vmatpush2.msra.mxu0 0.0
    %816 = vmatprep.subr.mxu0 0.0
    %817 = vmatpush2.msra.mxu0 0.0
    %818 = vmatprep.subr.mxu0 0.0
    %819 = vmatpush2.msra.mxu0 0.0
    %820 = vmatprep.subr.mxu0 0.0
    %821 = vmatpush2.msra.mxu0 0.0
    %822 = vmatprep.subr.mxu0 0.0
    %823 = vmatpush2.msra.mxu0 0.0
    %824 = vmatprep.subr.mxu0 0.0
    %825 = vmatpush2.msra.mxu0 0.0
    %826 = vmatprep.subr.mxu0 0.0
    %827 = vmatpush2.msra.mxu0 0.0
    %828 = vmatprep.subr.mxu0 0.0
    %829 = vmatpush2.msra.mxu0 0.0
    %830 = vmatprep.subr.mxu0 0.0
    %831 = vmatpush2.msra.mxu0 0.0
    %832 = vmatprep.subr.mxu0 0.0
    %833 = vmatpush2.msra.mxu0 0.0
    %834 = vmatprep.subr.mxu0 0.0
    %835 = vmatpush2.msra.mxu0 0.0
    %836 = vmatprep.subr.mxu0 0.0
    %837 = vmatpush2.msra.mxu0 0.0
    %838 = vmatprep.subr.mxu0 0.0
    %839 = vmatpush2.msra.mxu0 0.0
    %840 = vmatprep.subr.mxu0 0.0
    %841 = vmatpush2.msra.mxu0 0.0
    %842 = vmatprep.subr.mxu0 0.0
    %843 = vmatpush2.msra.mxu0 0.0
    %844 = vmatprep.subr.mxu0 0.0
    %845 = vmatpush2.msra.mxu0 0.0
    %846 = vmatprep.mubr.f32.mxu0 0.0
    %847 = vmatmul.mubr.f32.gmra.mxu0 %v758
    %v848 = vpop.f32.mrf.mxu0
    %v849 = vadd.f32 %v780, %v848
    %v850 = vpop.f32.mrf.mxu0
    %851 = vdwg.mxu0
    %v852 = vmax.f32 %v849, 0.0
    %v853 = vld [vmem:[#allocation16] sm:$0xff]
    %v854 = vld [vmem:[#allocation16 + $0x8] sm:$0xff]
    %v855 = vld [vmem:[#allocation16 + $0x10] sm:$0xff]
    %v856 = vld [vmem:[#allocation16 + $0x18] sm:$0xff]
    %v857 = vld [vmem:[#allocation16 + $0x20] sm:$0xff]
    %v858 = vld [vmem:[#allocation16 + $0x28] sm:$0xff]
    %v859 = vld [vmem:[#allocation16 + $0x30] sm:$0xff]
    %v860 = vld [vmem:[#allocation16 + $0x38] sm:$0xff]
    %v861 = vld [vmem:[#allocation16 + $0x40] sm:$0xff]
    %v862 = vld [vmem:[#allocation16 + $0x48] sm:$0xff]
    %v863 = vld [vmem:[#allocation16 + $0x50] sm:$0xff]
    %v864 = vld [vmem:[#allocation16 + $0x58] sm:$0xff]
    %v865 = vld [vmem:[#allocation16 + $0x60] sm:$0xff]
    %v866 = vld [vmem:[#allocation16 + $0x68] sm:$0xff]
    %v867 = vld [vmem:[#allocation16 + $0x70] sm:$0xff]
    %v868 = vld [vmem:[#allocation16 + $0x78] sm:$0xff]
    %v869 = vld [vmem:[%s18] sm:$0x1]
    %v871 = vlaneseq
    %v872 = vshrl.u32 %v871, 7
    %v873 = vsub.s32 0, %v872
    %v874 = vrot.slane %v869, %v873
    %876 = vmatprep.subr.mxu0 0.0
    %877 = vmatpush1.msra.mxu0 %v868
    %878 = vmatprep.subr.mxu0 0.0
    %879 = vmatpush1.msra.mxu0 %v867
    %880 = vmatprep.subr.mxu0 0.0
    %881 = vmatpush1.msra.mxu0 %v866
    %882 = vmatprep.subr.mxu0 0.0
    %883 = vmatpush1.msra.mxu0 %v865
    %884 = vmatprep.subr.mxu0 0.0
    %885 = vmatpush1.msra.mxu0 %v864
    %886 = vmatprep.subr.mxu0 0.0
    %887 = vmatpush1.msra.mxu0 %v863
    %888 = vmatprep.subr.mxu0 0.0
    %889 = vmatpush1.msra.mxu0 %v862
    %890 = vmatprep.subr.mxu0 0.0
    %891 = vmatpush1.msra.mxu0 %v861
    %892 = vmatprep.subr.mxu0 0.0
    %893 = vmatpush1.msra.mxu0 %v860
    %894 = vmatprep.subr.mxu0 0.0
    %895 = vmatpush1.msra.mxu0 %v859
    %896 = vmatprep.subr.mxu0 0.0
    %897 = vmatpush1.msra.mxu0 %v858
    %898 = vmatprep.subr.mxu0 0.0
    %899 = vmatpush1.msra.mxu0 %v857
    %900 = vmatprep.subr.mxu0 0.0
    %901 = vmatpush1.msra.mxu0 %v856
    %902 = vmatprep.subr.mxu0 0.0
    %903 = vmatpush1.msra.mxu0 %v855
    %904 = vmatprep.subr.mxu0 0.0
    %905 = vmatpush1.msra.mxu0 %v854
    %906 = vmatprep.subr.mxu0 0.0
    %907 = vmatpush1.msra.mxu0 %v853
    %908 = vmatprep.subr.mxu0 0.0
    %909 = vmatpush2.msra.mxu0 0.0
    %910 = vmatprep.subr.mxu0 0.0
    %911 = vmatpush2.msra.mxu0 0.0
    %912 = vmatprep.subr.mxu0 0.0
    %913 = vmatpush2.msra.mxu0 0.0
    %914 = vmatprep.subr.mxu0 0.0
    %915 = vmatpush2.msra.mxu0 0.0
    %916 = vmatprep.subr.mxu0 0.0
    %917 = vmatpush2.msra.mxu0 0.0
    %918 = vmatprep.subr.mxu0 0.0
    %919 = vmatpush2.msra.mxu0 0.0
    %920 = vmatprep.subr.mxu0 0.0
    %921 = vmatpush2.msra.mxu0 0.0
    %922 = vmatprep.subr.mxu0 0.0
    %923 = vmatpush2.msra.mxu0 0.0
    %924 = vmatprep.subr.mxu0 0.0
    %925 = vmatpush2.msra.mxu0 0.0
    %926 = vmatprep.subr.mxu0 0.0
    %927 = vmatpush2.msra.mxu0 0.0
    %928 = vmatprep.subr.mxu0 0.0
    %929 = vmatpush2.msra.mxu0 0.0
    %930 = vmatprep.subr.mxu0 0.0
    %931 = vmatpush2.msra.mxu0 0.0
    %932 = vmatprep.subr.mxu0 0.0
    %933 = vmatpush2.msra.mxu0 0.0
    %934 = vmatprep.subr.mxu0 0.0
    %935 = vmatpush2.msra.mxu0 0.0
    %936 = vmatprep.subr.mxu0 0.0
    %937 = vmatpush2.msra.mxu0 0.0
    %938 = vmatprep.subr.mxu0 0.0
    %939 = vmatpush2.msra.mxu0 0.0
    %940 = vmatprep.mubr.f32.mxu0 0.0
    %941 = vmatmul.mubr.f32.gmra.mxu0 %v852
    %v942 = vpop.f32.mrf.mxu0
    %v943 = vadd.f32 %v874, %v942
    %v944 = vpop.f32.mrf.mxu0
    %945 = vdwg.mxu0
    %v946 = vsub.f32 0.0, %v568
    %v947 = vmul.f32 %v946, 1.442695
    %v948 = vpow.pop %v947
    %v949 = vsub.f32 %v186, %v943
    %v951 = vlaneseq
    %v952 = vshrl.u32 %v951, 7
    %v953 = vsub.s32 0, %v952
    %v954 = vrot.slane %v188, %v953
    %v956 = vmul.f32 %v954, %v949
    %v957 = vmul.f32 %v956, %v948
    %v958 = vadd.f32 %v195, %v957
    %959 = vst [vmem:[#allocation17] sm:$0xff] %v958
    %v960 = vsub.f32 0.0, %v188
    %v962 = vlaneseq
    %v963 = vshrl.u32 %v962, 7
    %v964 = vsub.s32 0, %v963
    %v965 = vrot.slane %v960, %v964
    %v967 = vmul.f32 %v965, %v568
    %968 = vst [vmem:[#allocation18] sm:$0xff] %v967
    // Predicated region
    $region114: #{tpu_custom_call.1} parent=1 // pred_check
      _
    $region115: #{tpu_custom_call.1} parent=1 // pred_check_branch
      %970 = sbr.rel (0) target = $region117
    $region116: #{tpu_custom_call.1} parent=1 // pred_region
      %s972 = ssub.s32 128, 128
      %973 = vsyncadd [#allocation4], %s972
      %s975 = sshll.u32 [#allocation17], 4
      %s976 = int_to_ptr.vmem [resolvable:$true] %s975
      %978 = dma.vmem_to_hbm [thread:$0]  %s976, 128, %s19, [#allocation4]
    $region117: #{tpu_custom_call.1} parent=1 // pred_fallthru
      _
    // Predicated region
    $region118: #{tpu_custom_call.1} parent=1 // pred_check
      _
    $region119: #{tpu_custom_call.1} parent=1 // pred_check_branch
      %980 = sbr.rel (0) target = $region121
    $region120: #{tpu_custom_call.1} parent=1 // pred_region
      %s982 = ssub.s32 128, 128
      %983 = vsyncadd [#allocation19], %s982
      %s985 = sshll.u32 [#allocation18], 4
      %s986 = int_to_ptr.vmem [resolvable:$true] %s985
      %988 = dma.vmem_to_hbm [thread:$0]  %s986, 128, %s20, [#allocation19]
    $region121: #{tpu_custom_call.1} parent=1 // pred_fallthru
      _
    // Predicated region
    $region122: #{tpu_custom_call.1} parent=1 // pred_check
      _
    $region123: #{tpu_custom_call.1} parent=1 // pred_check_branch
      %990 = sbr.rel (0) target = $region125
    $region124: #{tpu_custom_call.1} parent=1 // pred_region
      %991 = dma.done [#allocation4], 128
    $region125: #{tpu_custom_call.1} parent=1 // pred_fallthru
      _
    // Predicated region
    $region126: #{tpu_custom_call.1} parent=1 // pred_check
      _
    $region127: #{tpu_custom_call.1} parent=1 // pred_check_branch
      %993 = sbr.rel (0) target = $region129
    $region128: #{tpu_custom_call.1} parent=1 // pred_region
      %994 = dma.done [#allocation19], 128
    $region129: #{tpu_custom_call.1} parent=1 // pred_fallthru
      _
    %995 = vsyncpa [#allocation3], 1
    %996 = vsyncpa [#allocation6], 1
    %997 = vsyncpa [#allocation9], 1
    %998 = vsyncpa [#allocation12], 1
    %999 = vsyncpa [#allocation15], 1
    %1000 = vsyncpa [#allocation4], 1
    %1001 = vsyncpa [#allocation19], 1

// kernel: tpu_custom_call.1
$region0: #{tpu_custom_call.1}
  #allocation0 [shape = 'u32[]', space=smem, size = 0x4, offset = 0x4, fixed_abs, tag = 'smem constant byte address 0x4 - core index']
  #allocation1 [shape = 'u32[144,128]{1,0:T(1,128)}', space=vmem, size = 0x12000, scoped, tag = 'internal scratch']
  %s0 = inlined_call_operand.hbm [shape: f32[8,128], index: 0, kind: input, shape index: {}]
  %s1 = inlined_call_operand.vmem [shape: f32[1,128], index: 1, kind: input, shape index: {}]
  %s2 = inlined_call_operand.vmem [shape: f32[1,128], index: 2, kind: input, shape index: {}]
  %s3 = inlined_call_operand.hbm [shape: f32[128,128], index: 3, kind: input, shape index: {}]
  %s4 = inlined_call_operand.vmem [shape: f32[1,128], index: 4, kind: input, shape index: {}]
  %s5 = inlined_call_operand.hbm [shape: f32[128,128], index: 5, kind: input, shape index: {}]
  %s6 = inlined_call_operand.vmem [shape: f32[1,128], index: 6, kind: input, shape index: {}]
  %s7 = inlined_call_operand.hbm [shape: f32[128,128], index: 7, kind: input, shape index: {}]
  %s8 = inlined_call_operand.vmem [shape: f32[1,128], index: 8, kind: input, shape index: {}]
  %s9 = inlined_call_operand.hbm [shape: f32[128,128], index: 9, kind: input, shape index: {}]
  %s10 = inlined_call_operand.vmem [shape: f32[1,128], index: 10, kind: input, shape index: {}]
  %s11 = inlined_call_operand.hbm [shape: f32[128,128], index: 11, kind: input, shape index: {}]
  %s12 = inlined_call_operand.vmem [shape: f32[1,128], index: 12, kind: input, shape index: {}]
  %s13 = inlined_call_operand.hbm [shape: f32[128,128], index: 13, kind: input, shape index: {}]
  %s14 = inlined_call_operand.vmem [shape: f32[1,128], index: 14, kind: input, shape index: {}]
  %s15 = inlined_call_operand.hbm [shape: f32[128,128], index: 15, kind: input, shape index: {}]
  %s16 = inlined_call_operand.vmem [shape: f32[1,128], index: 16, kind: input, shape index: {}]
  %s17 = inlined_call_operand.hbm [shape: f32[128,128], index: 17, kind: input, shape index: {}]
  %s18 = inlined_call_operand.vmem [shape: f32[1,128], index: 18, kind: input, shape index: {}]
  %s19 = inlined_call_operand.hbm [shape: f32[8,128], index: 19, kind: output, shape index: {0}]
  %s20 = inlined_call_operand.hbm [shape: f32[8,128], index: 20, kind: output, shape index: {1}]
  %21 = xla_tuple %s19, %s20
  %s22 = sld [smem:[#allocation0]]
  $region130: #{tpu_custom_call.1} parent=0
    _
  %s24 = ssub.s32 1, %s22
  %s25 = scalar_select 0, %s24, %s22
  $region1: #{tpu_custom_call.1} parent=0
    #allocation2 [shape = 'u8[4096]{0}', space=vmem, size = 0x1000, scoped, tag = 'input window, operand 0, single buffered']
    #allocation3 [shape = 's32[1]{0}', space=sflag, size = 0x4, scoped, tag = 'scoped memory for tpu_custom_call.1']
    #allocation4 [shape = 's32[1]{0}', space=sflag, size = 0x4, scoped, tag = 'scoped memory for tpu_custom_call.1']
    #allocation5 [shape = 'u8[65536]{0}', space=vmem, size = 0x10000, scoped, tag = 'input window, operand 3, single buffered']
    #allocation6 [shape = 's32[1]{0}', space=sflag, size = 0x4, scoped, tag = 'scoped memory for tpu_custom_call.1']
    #allocation7 [shape = 'u8[65536]{0}', space=vmem, size = 0x10000, scoped, tag = 'input window, operand 5, single buffered']
    #allocation8 [shape = 'u8[65536]{0}', space=vmem, size = 0x10000, scoped, tag = 'input window, operand 7, single buffered']
    #allocation9 [shape = 's32[1]{0}', space=sflag, size = 0x4, scoped, tag = 'scoped memory for tpu_custom_call.1']
    #allocation10 [shape = 'u8[65536]{0}', space=vmem, size = 0x10000, scoped, tag = 'input window, operand 9, single buffered']
    #allocation11 [shape = 'u8[65536]{0}', space=vmem, size = 0x10000, scoped, tag = 'input window, operand 11, single buffered']
    #allocation12 [shape = 's32[1]{0}', space=sflag, size = 0x4, scoped, tag = 'scoped memory for tpu_custom_call.1']
    #allocation13 [shape = 'u8[65536]{0}', space=vmem, size = 0x10000, scoped, tag = 'input window, operand 13, single buffered']
    #allocation14 [shape = 'u8[65536]{0}', space=vmem, size = 0x10000, scoped, tag = 'input window, operand 15, single buffered']
    #allocation15 [shape = 's32[1]{0}', space=sflag, size = 0x4, scoped, tag = 'scoped memory for tpu_custom_call.1']
    #allocation16 [shape = 'u8[65536]{0}', space=vmem, size = 0x10000, scoped, tag = 'input window, operand 17, single buffered']
    #allocation17 [shape = 'u8[4096]{0}', space=vmem, size = 0x1000, scoped, tag = 'output window, operand 0, single buffered']
    #allocation18 [shape = 'u8[4096]{0}', space=vmem, size = 0x1000, scoped, tag = 'output window, operand 1, single buffered']
    #allocation19 [shape = 's32[1]{0}', space=sflag, size = 0x4, scoped, tag = 'scoped memory for tpu_custom_call.1']
    %26 = vsyncpa [#allocation3], 0
    %27 = vsyncpa [#allocation6], 0
    %28 = vsyncpa [#allocation9], 0
    %29 = vsyncpa [#allocation12], 0
    %30 = vsyncpa [#allocation15], 0
    %31 = vsyncpa [#allocation4], 0
    %32 = vsyncpa [#allocation19], 0
    // Predicated region
    $region2: #{tpu_custom_call.1} parent=1 // pred_check
      _
    $region3: #{tpu_custom_call.1} parent=1 // pred_check_branch
      %34 = sbr.rel (0) target = $region5
    $region4: #{tpu_custom_call.1} parent=1 // pred_region
      %s36 = ssub.s32 128, 128
      %37 = vsyncadd [#allocation3], %s36
      %s39 = sshll.u32 [#allocation2], 4
      %s40 = int_to_ptr.vmem [resolvable:$true] %s39
      %42 = dma.hbm_to_vmem [thread:$0]  %s0, 128, %s40, [#allocation3]
    $region5: #{tpu_custom_call.1} parent=1 // pred_fallthru
      _
    // Predicated region
    $region6: #{tpu_custom_call.1} parent=1 // pred_check
      _
    $region7: #{tpu_custom_call.1} parent=1 // pred_check_branch
      %44 = sbr.rel (0) target = $region9
    $region8: #{tpu_custom_call.1} parent=1 // pred_region
      _
    $region9: #{tpu_custom_call.1} parent=1 // pred_fallthru
      _
    // Predicated region
    $region10: #{tpu_custom_call.1} parent=1 // pred_check
      _
    $region11: #{tpu_custom_call.1} parent=1 // pred_check_branch
      %46 = sbr.rel (0) target = $region13
    $region12: #{tpu_custom_call.1} parent=1 // pred_region
      _
    $region13: #{tpu_custom_call.1} parent=1 // pred_fallthru
      _
    // Predicated region
    $region14: #{tpu_custom_call.1} parent=1 // pred_check
      _
    $region15: #{tpu_custom_call.1} parent=1 // pred_check_branch
      %48 = sbr.rel (0) target = $region17
    $region16: #{tpu_custom_call.1} parent=1 // pred_region
      %s50 = ssub.s32 2048, 2048
      %51 = vsyncadd [#allocation6], %s50
      %s52 = sshll.u32 [#allocation5], 4
      %s53 = int_to_ptr.vmem [resolvable:$true] %s52
      %58 = dma.hbm_to_vmem [thread:$0]  %s3, 2048, %s53, [#allocation6], 128, 128, 8
    $region17: #{tpu_custom_call.1} parent=1 // pred_fallthru
      _
    // Predicated region
    $region18: #{tpu_custom_call.1} parent=1 // pred_check
      _
    $region19: #{tpu_custom_call.1} parent=1 // pred_check_branch
      %60 = sbr.rel (0) target = $region21
    $region20: #{tpu_custom_call.1} parent=1 // pred_region
      _
    $region21: #{tpu_custom_call.1} parent=1 // pred_fallthru
      _
    // Predicated region
    $region22: #{tpu_custom_call.1} parent=1 // pred_check
      _
    $region23: #{tpu_custom_call.1} parent=1 // pred_check_branch
      %62 = sbr.rel (0) target = $region25
    $region24: #{tpu_custom_call.1} parent=1 // pred_region
      %s64 = ssub.s32 2048, 2048
      %65 = vsyncadd [#allocation6], %s64
      %s66 = sshll.u32 [#allocation7], 4
      %s67 = int_to_ptr.vmem [resolvable:$true] %s66
      %72 = dma.hbm_to_vmem [thread:$0]  %s5, 2048, %s67, [#allocation6], 128, 128, 8
    $region25: #{tpu_custom_call.1} parent=1 // pred_fallthru
      _
    // Predicated region
    $region26: #{tpu_custom_call.1} parent=1 // pred_check
      _
    $region27: #{tpu_custom_call.1} parent=1 // pred_check_branch
      %74 = sbr.rel (0) target = $region29
    $region28: #{tpu_custom_call.1} parent=1 // pred_region
      _
    $region29: #{tpu_custom_call.1} parent=1 // pred_fallthru
      _
    // Predicated region
    $region30: #{tpu_custom_call.1} parent=1 // pred_check
      _
    $region31: #{tpu_custom_call.1} parent=1 // pred_check_branch
      %76 = sbr.rel (0) target = $region33
    $region32: #{tpu_custom_call.1} parent=1 // pred_region
      %s78 = ssub.s32 2048, 2048
      %79 = vsyncadd [#allocation9], %s78
      %s80 = sshll.u32 [#allocation8], 4
      %s81 = int_to_ptr.vmem [resolvable:$true] %s80
      %86 = dma.hbm_to_vmem [thread:$0]  %s7, 2048, %s81, [#allocation9], 128, 128, 8
    $region33: #{tpu_custom_call.1} parent=1 // pred_fallthru
      _
    // Predicated region
    $region34: #{tpu_custom_call.1} parent=1 // pred_check
      _
    $region35: #{tpu_custom_call.1} parent=1 // pred_check_branch
      %88 = sbr.rel (0) target = $region37
    $region36: #{tpu_custom_call.1} parent=1 // pred_region
      _
    $region37: #{tpu_custom_call.1} parent=1 // pred_fallthru
      _
    // Predicated region
    $region38: #{tpu_custom_call.1} parent=1 // pred_check
      _
    $region39: #{tpu_custom_call.1} parent=1 // pred_check_branch
      %90 = sbr.rel (0) target = $region41
    $region40: #{tpu_custom_call.1} parent=1 // pred_region
      %s92 = ssub.s32 2048, 2048
      %93 = vsyncadd [#allocation9], %s92
      %s94 = sshll.u32 [#allocation10], 4
      %s95 = int_to_ptr.vmem [resolvable:$true] %s94
      %100 = dma.hbm_to_vmem [thread:$0]  %s9, 2048, %s95, [#allocation9], 128, 128, 8
    $region41: #{tpu_custom_call.1} parent=1 // pred_fallthru
      _
    // Predicated region
    $region42: #{tpu_custom_call.1} parent=1 // pred_check
      _
    $region43: #{tpu_custom_call.1} parent=1 // pred_check_branch
      %102 = sbr.rel (0) target = $region45
    $region44: #{tpu_custom_call.1} parent=1 // pred_region
      _
    $region45: #{tpu_custom_call.1} parent=1 // pred_fallthru
      _
    // Predicated region
    $region46: #{tpu_custom_call.1} parent=1 // pred_check
      _
    $region47: #{tpu_custom_call.1} parent=1 // pred_check_branch
      %104 = sbr.rel (0) target = $region49
    $region48: #{tpu_custom_call.1} parent=1 // pred_region
      %s106 = ssub.s32 2048, 2048
      %107 = vsyncadd [#allocation12], %s106
      %s108 = sshll.u32 [#allocation11], 4
      %s109 = int_to_ptr.vmem [resolvable:$true] %s108
      %114 = dma.hbm_to_vmem [thread:$0]  %s11, 2048, %s109, [#allocation12], 128, 128, 8
    $region49: #{tpu_custom_call.1} parent=1 // pred_fallthru
      _
    // Predicated region
    $region50: #{tpu_custom_call.1} parent=1 // pred_check
      _
    $region51: #{tpu_custom_call.1} parent=1 // pred_check_branch
      %116 = sbr.rel (0) target = $region53
    $region52: #{tpu_custom_call.1} parent=1 // pred_region
      _
    $region53: #{tpu_custom_call.1} parent=1 // pred_fallthru
      _
    // Predicated region
    $region54: #{tpu_custom_call.1} parent=1 // pred_check
      _
    $region55: #{tpu_custom_call.1} parent=1 // pred_check_branch
      %118 = sbr.rel (0) target = $region57
    $region56: #{tpu_custom_call.1} parent=1 // pred_region
      %s120 = ssub.s32 2048, 2048
      %121 = vsyncadd [#allocation12], %s120
      %s122 = sshll.u32 [#allocation13], 4
      %s123 = int_to_ptr.vmem [resolvable:$true] %s122
      %128 = dma.hbm_to_vmem [thread:$0]  %s13, 2048, %s123, [#allocation12], 128, 128, 8
    $region57: #{tpu_custom_call.1} parent=1 // pred_fallthru
      _
    // Predicated region
    $region58: #{tpu_custom_call.1} parent=1 // pred_check
      _
    $region59: #{tpu_custom_call.1} parent=1 // pred_check_branch
      %130 = sbr.rel (0) target = $region61
    $region60: #{tpu_custom_call.1} parent=1 // pred_region
      _
    $region61: #{tpu_custom_call.1} parent=1 // pred_fallthru
      _
    // Predicated region
    $region62: #{tpu_custom_call.1} parent=1 // pred_check
      _
    $region63: #{tpu_custom_call.1} parent=1 // pred_check_branch
      %132 = sbr.rel (0) target = $region65
    $region64: #{tpu_custom_call.1} parent=1 // pred_region
      %s134 = ssub.s32 2048, 2048
      %135 = vsyncadd [#allocation15], %s134
      %s136 = sshll.u32 [#allocation14], 4
      %s137 = int_to_ptr.vmem [resolvable:$true] %s136
      %142 = dma.hbm_to_vmem [thread:$0]  %s15, 2048, %s137, [#allocation15], 128, 128, 8
    $region65: #{tpu_custom_call.1} parent=1 // pred_fallthru
      _
    // Predicated region
    $region66: #{tpu_custom_call.1} parent=1 // pred_check
      _
    $region67: #{tpu_custom_call.1} parent=1 // pred_check_branch
      %144 = sbr.rel (0) target = $region69
    $region68: #{tpu_custom_call.1} parent=1 // pred_region
      _
    $region69: #{tpu_custom_call.1} parent=1 // pred_fallthru
      _
    // Predicated region
    $region70: #{tpu_custom_call.1} parent=1 // pred_check
      _
    $region71: #{tpu_custom_call.1} parent=1 // pred_check_branch
      %146 = sbr.rel (0) target = $region73
    $region72: #{tpu_custom_call.1} parent=1 // pred_region
      %s148 = ssub.s32 2048, 2048
      %149 = vsyncadd [#allocation15], %s148
      %s150 = sshll.u32 [#allocation16], 4
      %s151 = int_to_ptr.vmem [resolvable:$true] %s150
      %156 = dma.hbm_to_vmem [thread:$0]  %s17, 2048, %s151, [#allocation15], 128, 128, 8
    $region73: #{tpu_custom_call.1} parent=1 // pred_fallthru
      _
    // Predicated region
    $region74: #{tpu_custom_call.1} parent=1 // pred_check
      _
    $region75: #{tpu_custom_call.1} parent=1 // pred_check_branch
      %158 = sbr.rel (0) target = $region77
    $region76: #{tpu_custom_call.1} parent=1 // pred_region
      _
    $region77: #{tpu_custom_call.1} parent=1 // pred_fallthru
      _
    // Predicated region
    $region78: #{tpu_custom_call.1} parent=1 // pred_check
      _
    $region79: #{tpu_custom_call.1} parent=1 // pred_check_branch
      %160 = sbr.rel (0) target = $region81
    $region80: #{tpu_custom_call.1} parent=1 // pred_region
      %161 = dma.done [#allocation3], 128
    $region81: #{tpu_custom_call.1} parent=1 // pred_fallthru
      _
    // Predicated region
    $region82: #{tpu_custom_call.1} parent=1 // pred_check
      _
    $region83: #{tpu_custom_call.1} parent=1 // pred_check_branch
      %163 = sbr.rel (0) target = $region85
    $region84: #{tpu_custom_call.1} parent=1 // pred_region
      %164 = dma.done [#allocation6], 2048
    $region85: #{tpu_custom_call.1} parent=1 // pred_fallthru
      _
    // Predicated region
    $region86: #{tpu_custom_call.1} parent=1 // pred_check
      _
    $region87: #{tpu_custom_call.1} parent=1 // pred_check_branch
      %166 = sbr.rel (0) target = $region89
    $region88: #{tpu_custom_call.1} parent=1 // pred_region
      %167 = dma.done [#allocation6], 2048
    $region89: #{tpu_custom_call.1} parent=1 // pred_fallthru
      _
    // Predicated region
    $region90: #{tpu_custom_call.1} parent=1 // pred_check
      _
    $region91: #{tpu_custom_call.1} parent=1 // pred_check_branch
      %169 = sbr.rel (0) target = $region93
    $region92: #{tpu_custom_call.1} parent=1 // pred_region
      %170 = dma.done [#allocation9], 2048
    $region93: #{tpu_custom_call.1} parent=1 // pred_fallthru
      _
    // Predicated region
    $region94: #{tpu_custom_call.1} parent=1 // pred_check
      _
    $region95: #{tpu_custom_call.1} parent=1 // pred_check_branch
      %172 = sbr.rel (0) target = $region97
    $region96: #{tpu_custom_call.1} parent=1 // pred_region
      %173 = dma.done [#allocation9], 2048
    $region97: #{tpu_custom_call.1} parent=1 // pred_fallthru
      _
    // Predicated region
    $region98: #{tpu_custom_call.1} parent=1 // pred_check
      _
    $region99: #{tpu_custom_call.1} parent=1 // pred_check_branch
      %175 = sbr.rel (0) target = $region101
    $region100: #{tpu_custom_call.1} parent=1 // pred_region
      %176 = dma.done [#allocation12], 2048
    $region101: #{tpu_custom_call.1} parent=1 // pred_fallthru
      _
    // Predicated region
    $region102: #{tpu_custom_call.1} parent=1 // pred_check
      _
    $region103: #{tpu_custom_call.1} parent=1 // pred_check_branch
      %178 = sbr.rel (0) target = $region105
    $region104: #{tpu_custom_call.1} parent=1 // pred_region
      %179 = dma.done [#allocation12], 2048
    $region105: #{tpu_custom_call.1} parent=1 // pred_fallthru
      _
    // Predicated region
    $region106: #{tpu_custom_call.1} parent=1 // pred_check
      _
    $region107: #{tpu_custom_call.1} parent=1 // pred_check_branch
      %181 = sbr.rel (0) target = $region109
    $region108: #{tpu_custom_call.1} parent=1 // pred_region
      %182 = dma.done [#allocation15], 2048
    $region109: #{tpu_custom_call.1} parent=1 // pred_fallthru
      _
    // Predicated region
    $region110: #{tpu_custom_call.1} parent=1 // pred_check
      _
    $region111: #{tpu_custom_call.1} parent=1 // pred_check_branch
      %184 = sbr.rel (0) target = $region113
    $region112: #{tpu_custom_call.1} parent=1 // pred_region
      %185 = dma.done [#allocation15], 2048
    $region113: #{tpu_custom_call.1} parent=1 // pred_fallthru
      _
    %v186 = vld [vmem:[#allocation2] sm:$0xff]
    %v187 = vld [vmem:[%s1] sm:$0x1]
    %v188 = vld [vmem:[%s2] sm:$0x1]
    %v190 = vlaneseq
    %v191 = vshrl.u32 %v190, 7
    %v192 = vsub.s32 0, %v191
    %v193 = vrot.slane %v187, %v192
    %v195 = vmul.f32 %v186, %v193
    %v196 = vld [vmem:[#allocation5] sm:$0xff]
    %v197 = vld [vmem:[#allocation5 + $0x8] sm:$0xff]
    %v198 = vld [vmem:[#allocation5 + $0x10] sm:$0xff]
    %v199 = vld [vmem:[#allocation5 + $0x18] sm:$0xff]
    %v200 = vld [vmem:[#allocation5 + $0x20] sm:$0xff]
    %v201 = vld [vmem:[#allocation5 + $0x28] sm:$0xff]
    %v202 = vld [vmem:[#allocation5 + $0x30] sm:$0xff]
    %v203 = vld [vmem:[#allocation5 + $0x38] sm:$0xff]
    %v204 = vld [vmem:[#allocation5 + $0x40] sm:$0xff]
    %v205 = vld [vmem:[#allocation5 + $0x48] sm:$0xff]
    %v206 = vld [vmem:[#allocation5 + $0x50] sm:$0xff]
    %v207 = vld [vmem:[#allocation5 + $0x58] sm:$0xff]
    %v208 = vld [vmem:[#allocation5 + $0x60] sm:$0xff]
    %v209 = vld [vmem:[#allocation5 + $0x68] sm:$0xff]
    %v210 = vld [vmem:[#allocation5 + $0x70] sm:$0xff]
    %v211 = vld [vmem:[#allocation5 + $0x78] sm:$0xff]
    %v212 = vld [vmem:[%s4] sm:$0x1]
    %v214 = vlaneseq
    %v215 = vshrl.u32 %v214, 7
    %v216 = vsub.s32 0, %v215
    %v217 = vrot.slane %v212, %v216
    %219 = vmatprep.subr.mxu0 0.0
    %220 = vmatpush1.msra.mxu0 %v211
    %221 = vmatprep.subr.mxu0 0.0
    %222 = vmatpush1.msra.mxu0 %v210
    %223 = vmatprep.subr.mxu0 0.0
    %224 = vmatpush1.msra.mxu0 %v209
    %225 = vmatprep.subr.mxu0 0.0
    %226 = vmatpush1.msra.mxu0 %v208
    %227 = vmatprep.subr.mxu0 0.0
    %228 = vmatpush1.msra.mxu0 %v207
    %229 = vmatprep.subr.mxu0 0.0
    %230 = vmatpush1.msra.mxu0 %v206
    %231 = vmatprep.subr.mxu0 0.0
    %232 = vmatpush1.msra.mxu0 %v205
    %233 = vmatprep.subr.mxu0 0.0
    %234 = vmatpush1.msra.mxu0 %v204
    %235 = vmatprep.subr.mxu0 0.0
    %236 = vmatpush1.msra.mxu0 %v203
    %237 = vmatprep.subr.mxu0 0.0
    %238 = vmatpush1.msra.mxu0 %v202
    %239 = vmatprep.subr.mxu0 0.0
    %240 = vmatpush1.msra.mxu0 %v201
    %241 = vmatprep.subr.mxu0 0.0
    %242 = vmatpush1.msra.mxu0 %v200
    %243 = vmatprep.subr.mxu0 0.0
    %244 = vmatpush1.msra.mxu0 %v199
    %245 = vmatprep.subr.mxu0 0.0
    %246 = vmatpush1.msra.mxu0 %v198
    %247 = vmatprep.subr.mxu0 0.0
    %248 = vmatpush1.msra.mxu0 %v197
    %249 = vmatprep.subr.mxu0 0.0
    %250 = vmatpush1.msra.mxu0 %v196
    %251 = vmatprep.subr.mxu0 0.0
    %252 = vmatpush2.msra.mxu0 0.0
    %253 = vmatprep.subr.mxu0 0.0
    %254 = vmatpush2.msra.mxu0 0.0
    %255 = vmatprep.subr.mxu0 0.0
    %256 = vmatpush2.msra.mxu0 0.0
    %257 = vmatprep.subr.mxu0 0.0
    %258 = vmatpush2.msra.mxu0 0.0
    %259 = vmatprep.subr.mxu0 0.0
    %260 = vmatpush2.msra.mxu0 0.0
    %261 = vmatprep.subr.mxu0 0.0
    %262 = vmatpush2.msra.mxu0 0.0
    %263 = vmatprep.subr.mxu0 0.0
    %264 = vmatpush2.msra.mxu0 0.0
    %265 = vmatprep.subr.mxu0 0.0
    %266 = vmatpush2.msra.mxu0 0.0
    %267 = vmatprep.subr.mxu0 0.0
    %268 = vmatpush2.msra.mxu0 0.0
    %269 = vmatprep.subr.mxu0 0.0
    %270 = vmatpush2.msra.mxu0 0.0
    %271 = vmatprep.subr.mxu0 0.0
    %272 = vmatpush2.msra.mxu0 0.0
    %273 = vmatprep.subr.mxu0 0.0
    %274 = vmatpush2.msra.mxu0 0.0
    %275 = vmatprep.subr.mxu0 0.0
    %276 = vmatpush2.msra.mxu0 0.0
    %277 = vmatprep.subr.mxu0 0.0
    %278 = vmatpush2.msra.mxu0 0.0
    %279 = vmatprep.subr.mxu0 0.0
    %280 = vmatpush2.msra.mxu0 0.0
    %281 = vmatprep.subr.mxu0 0.0
    %282 = vmatpush2.msra.mxu0 0.0
    %283 = vmatprep.mubr.f32.mxu0 0.0
    %284 = vmatmul.mubr.f32.gmra.mxu0 %v195
    %v285 = vpop.f32.mrf.mxu0
    %v286 = vadd.f32 %v217, %v285
    %v287 = vpop.f32.mrf.mxu0
    %288 = vdwg.mxu0
    %v289 = vtanh.pop %v286
    %v290 = vld [vmem:[#allocation7] sm:$0xff]
    %v291 = vld [vmem:[#allocation7 + $0x8] sm:$0xff]
    %v292 = vld [vmem:[#allocation7 + $0x10] sm:$0xff]
    %v293 = vld [vmem:[#allocation7 + $0x18] sm:$0xff]
    %v294 = vld [vmem:[#allocation7 + $0x20] sm:$0xff]
    %v295 = vld [vmem:[#allocation7 + $0x28] sm:$0xff]
    %v296 = vld [vmem:[#allocation7 + $0x30] sm:$0xff]
    %v297 = vld [vmem:[#allocation7 + $0x38] sm:$0xff]
    %v298 = vld [vmem:[#allocation7 + $0x40] sm:$0xff]
    %v299 = vld [vmem:[#allocation7 + $0x48] sm:$0xff]
    %v300 = vld [vmem:[#allocation7 + $0x50] sm:$0xff]
    %v301 = vld [vmem:[#allocation7 + $0x58] sm:$0xff]
    %v302 = vld [vmem:[#allocation7 + $0x60] sm:$0xff]
    %v303 = vld [vmem:[#allocation7 + $0x68] sm:$0xff]
    %v304 = vld [vmem:[#allocation7 + $0x70] sm:$0xff]
    %v305 = vld [vmem:[#allocation7 + $0x78] sm:$0xff]
    %v306 = vld [vmem:[%s6] sm:$0x1]
    %v308 = vlaneseq
    %v309 = vshrl.u32 %v308, 7
    %v310 = vsub.s32 0, %v309
    %v311 = vrot.slane %v306, %v310
    %313 = vmatprep.subr.mxu0 0.0
    %314 = vmatpush1.msra.mxu0 %v305
    %315 = vmatprep.subr.mxu0 0.0
    %316 = vmatpush1.msra.mxu0 %v304
    %317 = vmatprep.subr.mxu0 0.0
    %318 = vmatpush1.msra.mxu0 %v303
    %319 = vmatprep.subr.mxu0 0.0
    %320 = vmatpush1.msra.mxu0 %v302
    %321 = vmatprep.subr.mxu0 0.0
    %322 = vmatpush1.msra.mxu0 %v301
    %323 = vmatprep.subr.mxu0 0.0
    %324 = vmatpush1.msra.mxu0 %v300
    %325 = vmatprep.subr.mxu0 0.0
    %326 = vmatpush1.msra.mxu0 %v299
    %327 = vmatprep.subr.mxu0 0.0
    %328 = vmatpush1.msra.mxu0 %v298
    %329 = vmatprep.subr.mxu0 0.0
    %330 = vmatpush1.msra.mxu0 %v297
    %331 = vmatprep.subr.mxu0 0.0
    %332 = vmatpush1.msra.mxu0 %v296
    %333 = vmatprep.subr.mxu0 0.0
    %334 = vmatpush1.msra.mxu0 %v295
    %335 = vmatprep.subr.mxu0 0.0
    %336 = vmatpush1.msra.mxu0 %v294
    %337 = vmatprep.subr.mxu0 0.0
    %338 = vmatpush1.msra.mxu0 %v293
    %339 = vmatprep.subr.mxu0 0.0
    %340 = vmatpush1.msra.mxu0 %v292
    %341 = vmatprep.subr.mxu0 0.0
    %342 = vmatpush1.msra.mxu0 %v291
    %343 = vmatprep.subr.mxu0 0.0
    %344 = vmatpush1.msra.mxu0 %v290
    %345 = vmatprep.subr.mxu0 0.0
    %346 = vmatpush2.msra.mxu0 0.0
    %347 = vmatprep.subr.mxu0 0.0
    %348 = vmatpush2.msra.mxu0 0.0
    %349 = vmatprep.subr.mxu0 0.0
    %350 = vmatpush2.msra.mxu0 0.0
    %351 = vmatprep.subr.mxu0 0.0
    %352 = vmatpush2.msra.mxu0 0.0
    %353 = vmatprep.subr.mxu0 0.0
    %354 = vmatpush2.msra.mxu0 0.0
    %355 = vmatprep.subr.mxu0 0.0
    %356 = vmatpush2.msra.mxu0 0.0
    %357 = vmatprep.subr.mxu0 0.0
    %358 = vmatpush2.msra.mxu0 0.0
    %359 = vmatprep.subr.mxu0 0.0
    %360 = vmatpush2.msra.mxu0 0.0
    %361 = vmatprep.subr.mxu0 0.0
    %362 = vmatpush2.msra.mxu0 0.0
    %363 = vmatprep.subr.mxu0 0.0
    %364 = vmatpush2.msra.mxu0 0.0
    %365 = vmatprep.subr.mxu0 0.0
    %366 = vmatpush2.msra.mxu0 0.0
    %367 = vmatprep.subr.mxu0 0.0
    %368 = vmatpush2.msra.mxu0 0.0
    %369 = vmatprep.subr.mxu0 0.0
    %370 = vmatpush2.msra.mxu0 0.0
    %371 = vmatprep.subr.mxu0 0.0
    %372 = vmatpush2.msra.mxu0 0.0
    %373 = vmatprep.subr.mxu0 0.0
    %374 = vmatpush2.msra.mxu0 0.0
    %375 = vmatprep.subr.mxu0 0.0
    %376 = vmatpush2.msra.mxu0 0.0
    %377 = vmatprep.mubr.f32.mxu0 0.0
    %378 = vmatmul.mubr.f32.gmra.mxu0 %v289
    %v379 = vpop.f32.mrf.mxu0
    %v380 = vadd.f32 %v311, %v379
    %v381 = vpop.f32.mrf.mxu0
    %382 = vdwg.mxu0
    %v383 = vtanh.pop %v380
    %v384 = vld [vmem:[#allocation8] sm:$0xff]
    %v385 = vld [vmem:[#allocation8 + $0x8] sm:$0xff]
    %v386 = vld [vmem:[#allocation8 + $0x10] sm:$0xff]
    %v387 = vld [vmem:[#allocation8 + $0x18] sm:$0xff]
    %v388 = vld [vmem:[#allocation8 + $0x20] sm:$0xff]
    %v389 = vld [vmem:[#allocation8 + $0x28] sm:$0xff]
    %v390 = vld [vmem:[#allocation8 + $0x30] sm:$0xff]
    %v391 = vld [vmem:[#allocation8 + $0x38] sm:$0xff]
    %v392 = vld [vmem:[#allocation8 + $0x40] sm:$0xff]
    %v393 = vld [vmem:[#allocation8 + $0x48] sm:$0xff]
    %v394 = vld [vmem:[#allocation8 + $0x50] sm:$0xff]
    %v395 = vld [vmem:[#allocation8 + $0x58] sm:$0xff]
    %v396 = vld [vmem:[#allocation8 + $0x60] sm:$0xff]
    %v397 = vld [vmem:[#allocation8 + $0x68] sm:$0xff]
    %v398 = vld [vmem:[#allocation8 + $0x70] sm:$0xff]
    %v399 = vld [vmem:[#allocation8 + $0x78] sm:$0xff]
    %v400 = vld [vmem:[%s8] sm:$0x1]
    %v402 = vlaneseq
    %v403 = vshrl.u32 %v402, 7
    %v404 = vsub.s32 0, %v403
    %v405 = vrot.slane %v400, %v404
    %407 = vmatprep.subr.mxu0 0.0
    %408 = vmatpush1.msra.mxu0 %v399
    %409 = vmatprep.subr.mxu0 0.0
    %410 = vmatpush1.msra.mxu0 %v398
    %411 = vmatprep.subr.mxu0 0.0
    %412 = vmatpush1.msra.mxu0 %v397
    %413 = vmatprep.subr.mxu0 0.0
    %414 = vmatpush1.msra.mxu0 %v396
    %415 = vmatprep.subr.mxu0 0.0
    %416 = vmatpush1.msra.mxu0 %v395
    %417 = vmatprep.subr.mxu0 0.0
    %418 = vmatpush1.msra.mxu0 %v394
    %419 = vmatprep.subr.mxu0 0.0
    %420 = vmatpush1.msra.mxu0 %v393
    %421 = vmatprep.subr.mxu0 0.0
    %422 = vmatpush1.msra.mxu0 %v392
    %423 = vmatprep.subr.mxu0 0.0
    %424 = vmatpush1.msra.mxu0 %v391
    %425 = vmatprep.subr.mxu0 0.0
    %426 = vmatpush1.msra.mxu0 %v390
    %427 = vmatprep.subr.mxu0 0.0
    %428 = vmatpush1.msra.mxu0 %v389
    %429 = vmatprep.subr.mxu0 0.0
    %430 = vmatpush1.msra.mxu0 %v388
    %431 = vmatprep.subr.mxu0 0.0
    %432 = vmatpush1.msra.mxu0 %v387
    %433 = vmatprep.subr.mxu0 0.0
    %434 = vmatpush1.msra.mxu0 %v386
    %435 = vmatprep.subr.mxu0 0.0
    %436 = vmatpush1.msra.mxu0 %v385
    %437 = vmatprep.subr.mxu0 0.0
    %438 = vmatpush1.msra.mxu0 %v384
    %439 = vmatprep.subr.mxu0 0.0
    %440 = vmatpush2.msra.mxu0 0.0
    %441 = vmatprep.subr.mxu0 0.0
    %442 = vmatpush2.msra.mxu0 0.0
    %443 = vmatprep.subr.mxu0 0.0
    %444 = vmatpush2.msra.mxu0 0.0
    %445 = vmatprep.subr.mxu0 0.0
    %446 = vmatpush2.msra.mxu0 0.0
    %447 = vmatprep.subr.mxu0 0.0
    %448 = vmatpush2.msra.mxu0 0.0
    %449 = vmatprep.subr.mxu0 0.0
    %450 = vmatpush2.msra.mxu0 0.0
    %451 = vmatprep.subr.mxu0 0.0
    %452 = vmatpush2.msra.mxu0 0.0
    %453 = vmatprep.subr.mxu0 0.0
    %454 = vmatpush2.msra.mxu0 0.0
    %455 = vmatprep.subr.mxu0 0.0
    %456 = vmatpush2.msra.mxu0 0.0
    %457 = vmatprep.subr.mxu0 0.0
    %458 = vmatpush2.msra.mxu0 0.0
    %459 = vmatprep.subr.mxu0 0.0
    %460 = vmatpush2.msra.mxu0 0.0
    %461 = vmatprep.subr.mxu0 0.0
    %462 = vmatpush2.msra.mxu0 0.0
    %463 = vmatprep.subr.mxu0 0.0
    %464 = vmatpush2.msra.mxu0 0.0
    %465 = vmatprep.subr.mxu0 0.0
    %466 = vmatpush2.msra.mxu0 0.0
    %467 = vmatprep.subr.mxu0 0.0
    %468 = vmatpush2.msra.mxu0 0.0
    %469 = vmatprep.subr.mxu0 0.0
    %470 = vmatpush2.msra.mxu0 0.0
    %471 = vmatprep.mubr.f32.mxu0 0.0
    %472 = vmatmul.mubr.f32.gmra.mxu0 %v383
    %v473 = vpop.f32.mrf.mxu0
    %v474 = vadd.f32 %v405, %v473
    %v475 = vpop.f32.mrf.mxu0
    %476 = vdwg.mxu0
    %v477 = vtanh.pop %v474
    %v478 = vld [vmem:[#allocation10] sm:$0xff]
    %v479 = vld [vmem:[#allocation10 + $0x8] sm:$0xff]
    %v480 = vld [vmem:[#allocation10 + $0x10] sm:$0xff]
    %v481 = vld [vmem:[#allocation10 + $0x18] sm:$0xff]
    %v482 = vld [vmem:[#allocation10 + $0x20] sm:$0xff]
    %v483 = vld [vmem:[#allocation10 + $0x28] sm:$0xff]
    %v484 = vld [vmem:[#allocation10 + $0x30] sm:$0xff]
    %v485 = vld [vmem:[#allocation10 + $0x38] sm:$0xff]
    %v486 = vld [vmem:[#allocation10 + $0x40] sm:$0xff]
    %v487 = vld [vmem:[#allocation10 + $0x48] sm:$0xff]
    %v488 = vld [vmem:[#allocation10 + $0x50] sm:$0xff]
    %v489 = vld [vmem:[#allocation10 + $0x58] sm:$0xff]
    %v490 = vld [vmem:[#allocation10 + $0x60] sm:$0xff]
    %v491 = vld [vmem:[#allocation10 + $0x68] sm:$0xff]
    %v492 = vld [vmem:[#allocation10 + $0x70] sm:$0xff]
    %v493 = vld [vmem:[#allocation10 + $0x78] sm:$0xff]
    %v494 = vld [vmem:[%s10] sm:$0x1]
    %v496 = vlaneseq
    %v497 = vshrl.u32 %v496, 7
    %v498 = vsub.s32 0, %v497
    %v499 = vrot.slane %v494, %v498
    %501 = vmatprep.subr.mxu0 0.0
    %502 = vmatpush1.msra.mxu0 %v493
    %503 = vmatprep.subr.mxu0 0.0
    %504 = vmatpush1.msra.mxu0 %v492
    %505 = vmatprep.subr.mxu0 0.0
    %506 = vmatpush1.msra.mxu0 %v491
    %507 = vmatprep.subr.mxu0 0.0
    %508 = vmatpush1.msra.mxu0 %v490
    %509 = vmatprep.subr.mxu0 0.0
    %510 = vmatpush1.msra.mxu0 %v489
    %511 = vmatprep.subr.mxu0 0.0
    %512 = vmatpush1.msra.mxu0 %v488
    %513 = vmatprep.subr.mxu0 0.0
    %514 = vmatpush1.msra.mxu0 %v487
    %515 = vmatprep.subr.mxu0 0.0
    %516 = vmatpush1.msra.mxu0 %v486
    %517 = vmatprep.subr.mxu0 0.0
    %518 = vmatpush1.msra.mxu0 %v485
    %519 = vmatprep.subr.mxu0 0.0
    %520 = vmatpush1.msra.mxu0 %v484
    %521 = vmatprep.subr.mxu0 0.0
    %522 = vmatpush1.msra.mxu0 %v483
    %523 = vmatprep.subr.mxu0 0.0
    %524 = vmatpush1.msra.mxu0 %v482
    %525 = vmatprep.subr.mxu0 0.0
    %526 = vmatpush1.msra.mxu0 %v481
    %527 = vmatprep.subr.mxu0 0.0
    %528 = vmatpush1.msra.mxu0 %v480
    %529 = vmatprep.subr.mxu0 0.0
    %530 = vmatpush1.msra.mxu0 %v479
    %531 = vmatprep.subr.mxu0 0.0
    %532 = vmatpush1.msra.mxu0 %v478
    %533 = vmatprep.subr.mxu0 0.0
    %534 = vmatpush2.msra.mxu0 0.0
    %535 = vmatprep.subr.mxu0 0.0
    %536 = vmatpush2.msra.mxu0 0.0
    %537 = vmatprep.subr.mxu0 0.0
    %538 = vmatpush2.msra.mxu0 0.0
    %539 = vmatprep.subr.mxu0 0.0
    %540 = vmatpush2.msra.mxu0 0.0
    %541 = vmatprep.subr.mxu0 0.0
    %542 = vmatpush2.msra.mxu0 0.0
    %543 = vmatprep.subr.mxu0 0.0
    %544 = vmatpush2.msra.mxu0 0.0
    %545 = vmatprep.subr.mxu0 0.0
    %546 = vmatpush2.msra.mxu0 0.0
    %547 = vmatprep.subr.mxu0 0.0
    %548 = vmatpush2.msra.mxu0 0.0
    %549 = vmatprep.subr.mxu0 0.0
    %550 = vmatpush2.msra.mxu0 0.0
    %551 = vmatprep.subr.mxu0 0.0
    %552 = vmatpush2.msra.mxu0 0.0
    %553 = vmatprep.subr.mxu0 0.0
    %554 = vmatpush2.msra.mxu0 0.0
    %555 = vmatprep.subr.mxu0 0.0
    %556 = vmatpush2.msra.mxu0 0.0
    %557 = vmatprep.subr.mxu0 0.0
    %558 = vmatpush2.msra.mxu0 0.0
    %559 = vmatprep.subr.mxu0 0.0
    %560 = vmatpush2.msra.mxu0 0.0
    %561 = vmatprep.subr.mxu0 0.0
    %562 = vmatpush2.msra.mxu0 0.0
    %563 = vmatprep.subr.mxu0 0.0
    %564 = vmatpush2.msra.mxu0 0.0
    %565 = vmatprep.mubr.f32.mxu0 0.0
    %566 = vmatmul.mubr.f32.gmra.mxu0 %v477
    %v567 = vpop.f32.mrf.mxu0
    %v568 = vadd.f32 %v499, %v567
    %v569 = vpop.f32.mrf.mxu0
    %570 = vdwg.mxu0
    %v571 = vld [vmem:[#allocation11] sm:$0xff]
    %v572 = vld [vmem:[#allocation11 + $0x8] sm:$0xff]
    %v573 = vld [vmem:[#allocation11 + $0x10] sm:$0xff]
    %v574 = vld [vmem:[#allocation11 + $0x18] sm:$0xff]
    %v575 = vld [vmem:[#allocation11 + $0x20] sm:$0xff]
    %v576 = vld [vmem:[#allocation11 + $0x28] sm:$0xff]
    %v577 = vld [vmem:[#allocation11 + $0x30] sm:$0xff]
    %v578 = vld [vmem:[#allocation11 + $0x38] sm:$0xff]
    %v579 = vld [vmem:[#allocation11 + $0x40] sm:$0xff]
    %v580 = vld [vmem:[#allocation11 + $0x48] sm:$0xff]
    %v581 = vld [vmem:[#allocation11 + $0x50] sm:$0xff]
    %v582 = vld [vmem:[#allocation11 + $0x58] sm:$0xff]
    %v583 = vld [vmem:[#allocation11 + $0x60] sm:$0xff]
    %v584 = vld [vmem:[#allocation11 + $0x68] sm:$0xff]
    %v585 = vld [vmem:[#allocation11 + $0x70] sm:$0xff]
    %v586 = vld [vmem:[#allocation11 + $0x78] sm:$0xff]
    %v587 = vld [vmem:[%s12] sm:$0x1]
    %v589 = vlaneseq
    %v590 = vshrl.u32 %v589, 7
    %v591 = vsub.s32 0, %v590
    %v592 = vrot.slane %v587, %v591
    %594 = vmatprep.subr.mxu0 0.0
    %595 = vmatpush1.msra.mxu0 %v586
    %596 = vmatprep.subr.mxu0 0.0
    %597 = vmatpush1.msra.mxu0 %v585
    %598 = vmatprep.subr.mxu0 0.0
    %599 = vmatpush1.msra.mxu0 %v584
    %600 = vmatprep.subr.mxu0 0.0
    %601 = vmatpush1.msra.mxu0 %v583
    %602 = vmatprep.subr.mxu0 0.0
    %603 = vmatpush1.msra.mxu0 %v582
    %604 = vmatprep.subr.mxu0 0.0
    %605 = vmatpush1.msra.mxu0 %v581
    %606 = vmatprep.subr.mxu0 0.0
    %607 = vmatpush1.msra.mxu0 %v580
    %608 = vmatprep.subr.mxu0 0.0
    %609 = vmatpush1.msra.mxu0 %v579
    %610 = vmatprep.subr.mxu0 0.0
    %611 = vmatpush1.msra.mxu0 %v578
    %612 = vmatprep.subr.mxu0 0.0
    %613 = vmatpush1.msra.mxu0 %v577
    %614 = vmatprep.subr.mxu0 0.0
    %615 = vmatpush1.msra.mxu0 %v576
    %616 = vmatprep.subr.mxu0 0.0
    %617 = vmatpush1.msra.mxu0 %v575
    %618 = vmatprep.subr.mxu0 0.0
    %619 = vmatpush1.msra.mxu0 %v574
    %620 = vmatprep.subr.mxu0 0.0
    %621 = vmatpush1.msra.mxu0 %v573
    %622 = vmatprep.subr.mxu0 0.0
    %623 = vmatpush1.msra.mxu0 %v572
    %624 = vmatprep.subr.mxu0 0.0
    %625 = vmatpush1.msra.mxu0 %v571
    %626 = vmatprep.subr.mxu0 0.0
    %627 = vmatpush2.msra.mxu0 0.0
    %628 = vmatprep.subr.mxu0 0.0
    %629 = vmatpush2.msra.mxu0 0.0
    %630 = vmatprep.subr.mxu0 0.0
    %631 = vmatpush2.msra.mxu0 0.0
    %632 = vmatprep.subr.mxu0 0.0
    %633 = vmatpush2.msra.mxu0 0.0
    %634 = vmatprep.subr.mxu0 0.0
    %635 = vmatpush2.msra.mxu0 0.0
    %636 = vmatprep.subr.mxu0 0.0
    %637 = vmatpush2.msra.mxu0 0.0
    %638 = vmatprep.subr.mxu0 0.0
    %639 = vmatpush2.msra.mxu0 0.0
    %640 = vmatprep.subr.mxu0 0.0
    %641 = vmatpush2.msra.mxu0 0.0
    %642 = vmatprep.subr.mxu0 0.0
    %643 = vmatpush2.msra.mxu0 0.0
    %644 = vmatprep.subr.mxu0 0.0
    %645 = vmatpush2.msra.mxu0 0.0
    %646 = vmatprep.subr.mxu0 0.0
    %647 = vmatpush2.msra.mxu0 0.0
    %648 = vmatprep.subr.mxu0 0.0
    %649 = vmatpush2.msra.mxu0 0.0
    %650 = vmatprep.subr.mxu0 0.0
    %651 = vmatpush2.msra.mxu0 0.0
    %652 = vmatprep.subr.mxu0 0.0
    %653 = vmatpush2.msra.mxu0 0.0
    %654 = vmatprep.subr.mxu0 0.0
    %655 = vmatpush2.msra.mxu0 0.0
    %656 = vmatprep.subr.mxu0 0.0
    %657 = vmatpush2.msra.mxu0 0.0
    %658 = vmatprep.mubr.f32.mxu0 0.0
    %659 = vmatmul.mubr.f32.gmra.mxu0 %v195
    %v660 = vpop.f32.mrf.mxu0
    %v661 = vadd.f32 %v592, %v660
    %v662 = vpop.f32.mrf.mxu0
    %663 = vdwg.mxu0
    %v664 = vmax.f32 %v661, 0.0
    %v665 = vld [vmem:[#allocation13] sm:$0xff]
    %v666 = vld [vmem:[#allocation13 + $0x8] sm:$0xff]
    %v667 = vld [vmem:[#allocation13 + $0x10] sm:$0xff]
    %v668 = vld [vmem:[#allocation13 + $0x18] sm:$0xff]
    %v669 = vld [vmem:[#allocation13 + $0x20] sm:$0xff]
    %v670 = vld [vmem:[#allocation13 + $0x28] sm:$0xff]
    %v671 = vld [vmem:[#allocation13 + $0x30] sm:$0xff]
    %v672 = vld [vmem:[#allocation13 + $0x38] sm:$0xff]
    %v673 = vld [vmem:[#allocation13 + $0x40] sm:$0xff]
    %v674 = vld [vmem:[#allocation13 + $0x48] sm:$0xff]
    %v675 = vld [vmem:[#allocation13 + $0x50] sm:$0xff]
    %v676 = vld [vmem:[#allocation13 + $0x58] sm:$0xff]
    %v677 = vld [vmem:[#allocation13 + $0x60] sm:$0xff]
    %v678 = vld [vmem:[#allocation13 + $0x68] sm:$0xff]
    %v679 = vld [vmem:[#allocation13 + $0x70] sm:$0xff]
    %v680 = vld [vmem:[#allocation13 + $0x78] sm:$0xff]
    %v681 = vld [vmem:[%s14] sm:$0x1]
    %v683 = vlaneseq
    %v684 = vshrl.u32 %v683, 7
    %v685 = vsub.s32 0, %v684
    %v686 = vrot.slane %v681, %v685
    %688 = vmatprep.subr.mxu0 0.0
    %689 = vmatpush1.msra.mxu0 %v680
    %690 = vmatprep.subr.mxu0 0.0
    %691 = vmatpush1.msra.mxu0 %v679
    %692 = vmatprep.subr.mxu0 0.0
    %693 = vmatpush1.msra.mxu0 %v678
    %694 = vmatprep.subr.mxu0 0.0
    %695 = vmatpush1.msra.mxu0 %v677
    %696 = vmatprep.subr.mxu0 0.0
    %697 = vmatpush1.msra.mxu0 %v676
    %698 = vmatprep.subr.mxu0 0.0
    %699 = vmatpush1.msra.mxu0 %v675
    %700 = vmatprep.subr.mxu0 0.0
    %701 = vmatpush1.msra.mxu0 %v674
    %702 = vmatprep.subr.mxu0 0.0
    %703 = vmatpush1.msra.mxu0 %v673
    %704 = vmatprep.subr.mxu0 0.0
    %705 = vmatpush1.msra.mxu0 %v672
    %706 = vmatprep.subr.mxu0 0.0
    %707 = vmatpush1.msra.mxu0 %v671
    %708 = vmatprep.subr.mxu0 0.0
    %709 = vmatpush1.msra.mxu0 %v670
    %710 = vmatprep.subr.mxu0 0.0
    %711 = vmatpush1.msra.mxu0 %v669
    %712 = vmatprep.subr.mxu0 0.0
    %713 = vmatpush1.msra.mxu0 %v668
    %714 = vmatprep.subr.mxu0 0.0
    %715 = vmatpush1.msra.mxu0 %v667
    %716 = vmatprep.subr.mxu0 0.0
    %717 = vmatpush1.msra.mxu0 %v666
    %718 = vmatprep.subr.mxu0 0.0
    %719 = vmatpush1.msra.mxu0 %v665
    %720 = vmatprep.subr.mxu0 0.0
    %721 = vmatpush2.msra.mxu0 0.0
    %722 = vmatprep.subr.mxu0 0.0
    %723 = vmatpush2.msra.mxu0 0.0
    %724 = vmatprep.subr.mxu0 0.0
    %725 = vmatpush2.msra.mxu0 0.0
    %726 = vmatprep.subr.mxu0 0.0
    %727 = vmatpush2.msra.mxu0 0.0
    %728 = vmatprep.subr.mxu0 0.0
    %729 = vmatpush2.msra.mxu0 0.0
    %730 = vmatprep.subr.mxu0 0.0
    %731 = vmatpush2.msra.mxu0 0.0
    %732 = vmatprep.subr.mxu0 0.0
    %733 = vmatpush2.msra.mxu0 0.0
    %734 = vmatprep.subr.mxu0 0.0
    %735 = vmatpush2.msra.mxu0 0.0
    %736 = vmatprep.subr.mxu0 0.0
    %737 = vmatpush2.msra.mxu0 0.0
    %738 = vmatprep.subr.mxu0 0.0
    %739 = vmatpush2.msra.mxu0 0.0
    %740 = vmatprep.subr.mxu0 0.0
    %741 = vmatpush2.msra.mxu0 0.0
    %742 = vmatprep.subr.mxu0 0.0
    %743 = vmatpush2.msra.mxu0 0.0
    %744 = vmatprep.subr.mxu0 0.0
    %745 = vmatpush2.msra.mxu0 0.0
    %746 = vmatprep.subr.mxu0 0.0
    %747 = vmatpush2.msra.mxu0 0.0
    %748 = vmatprep.subr.mxu0 0.0
    %749 = vmatpush2.msra.mxu0 0.0
    %750 = vmatprep.subr.mxu0 0.0
    %751 = vmatpush2.msra.mxu0 0.0
    %752 = vmatprep.mubr.f32.mxu0 0.0
    %753 = vmatmul.mubr.f32.gmra.mxu0 %v664
    %v754 = vpop.f32.mrf.mxu0
    %v755 = vadd.f32 %v686, %v754
    %v756 = vpop.f32.mrf.mxu0
    %757 = vdwg.mxu0
    %v758 = vmax.f32 %v755, 0.0
    %v759 = vld [vmem:[#allocation14] sm:$0xff]
    %v760 = vld [vmem:[#allocation14 + $0x8] sm:$0xff]
    %v761 = vld [vmem:[#allocation14 + $0x10] sm:$0xff]
    %v762 = vld [vmem:[#allocation14 + $0x18] sm:$0xff]
    %v763 = vld [vmem:[#allocation14 + $0x20] sm:$0xff]
    %v764 = vld [vmem:[#allocation14 + $0x28] sm:$0xff]
    %v765 = vld [vmem:[#allocation14 + $0x30] sm:$0xff]
    %v766 = vld [vmem:[#allocation14 + $0x38] sm:$0xff]
    %v767 = vld [vmem:[#allocation14 + $0x40] sm:$0xff]
    %v768 = vld [vmem:[#allocation14 + $0x48] sm:$0xff]
    %v769 = vld [vmem:[#allocation14 + $0x50] sm:$0xff]
    %v770 = vld [vmem:[#allocation14 + $0x58] sm:$0xff]
    %v771 = vld [vmem:[#allocation14 + $0x60] sm:$0xff]
    %v772 = vld [vmem:[#allocation14 + $0x68] sm:$0xff]
    %v773 = vld [vmem:[#allocation14 + $0x70] sm:$0xff]
    %v774 = vld [vmem:[#allocation14 + $0x78] sm:$0xff]
    %v775 = vld [vmem:[%s16] sm:$0x1]
    %v777 = vlaneseq
    %v778 = vshrl.u32 %v777, 7
    %v779 = vsub.s32 0, %v778
    %v780 = vrot.slane %v775, %v779
    %782 = vmatprep.subr.mxu0 0.0
    %783 = vmatpush1.msra.mxu0 %v774
    %784 = vmatprep.subr.mxu0 0.0
    %785 = vmatpush1.msra.mxu0 %v773
    %786 = vmatprep.subr.mxu0 0.0
    %787 = vmatpush1.msra.mxu0 %v772
    %788 = vmatprep.subr.mxu0 0.0
    %789 = vmatpush1.msra.mxu0 %v771
    %790 = vmatprep.subr.mxu0 0.0
    %791 = vmatpush1.msra.mxu0 %v770
    %792 = vmatprep.subr.mxu0 0.0
    %793 = vmatpush1.msra.mxu0 %v769
    %794 = vmatprep.subr.mxu0 0.0
    %795 = vmatpush1.msra.mxu0 %v768
    %796 = vmatprep.subr.mxu0 0.0
    %797 = vmatpush1.msra.mxu0 %v767
    %798 = vmatprep.subr.mxu0 0.0
    %799 = vmatpush1.msra.mxu0 %v766
    %800 = vmatprep.subr.mxu0 0.0
    %801 = vmatpush1.msra.mxu0 %v765
    %802 = vmatprep.subr.mxu0 0.0
    %803 = vmatpush1.msra.mxu0 %v764
    %804 = vmatprep.subr.mxu0 0.0
    %805 = vmatpush1.msra.mxu0 %v763
    %806 = vmatprep.subr.mxu0 0.0
    %807 = vmatpush1.msra.mxu0 %v762
    %808 = vmatprep.subr.mxu0 0.0
    %809 = vmatpush1.msra.mxu0 %v761
    %810 = vmatprep.subr.mxu0 0.0
    %811 = vmatpush1.msra.mxu0 %v760
    %812 = vmatprep.subr.mxu0 0.0
    %813 = vmatpush1.msra.mxu0 %v759
    %814 = vmatprep.subr.mxu0 0.0
    %815 = vmatpush2.msra.mxu0 0.0
    %816 = vmatprep.subr.mxu0 0.0
    %817 = vmatpush2.msra.mxu0 0.0
    %818 = vmatprep.subr.mxu0 0.0
    %819 = vmatpush2.msra.mxu0 0.0
    %820 = vmatprep.subr.mxu0 0.0
    %821 = vmatpush2.msra.mxu0 0.0
    %822 = vmatprep.subr.mxu0 0.0
    %823 = vmatpush2.msra.mxu0 0.0
    %824 = vmatprep.subr.mxu0 0.0
    %825 = vmatpush2.msra.mxu0 0.0
    %826 = vmatprep.subr.mxu0 0.0
    %827 = vmatpush2.msra.mxu0 0.0
    %828 = vmatprep.subr.mxu0 0.0
    %829 = vmatpush2.msra.mxu0 0.0
    %830 = vmatprep.subr.mxu0 0.0
    %831 = vmatpush2.msra.mxu0 0.0
    %832 = vmatprep.subr.mxu0 0.0
    %833 = vmatpush2.msra.mxu0 0.0
    %834 = vmatprep.subr.mxu0 0.0
    %835 = vmatpush2.msra.mxu0 0.0
    %836 = vmatprep.subr.mxu0 0.0
    %837 = vmatpush2.msra.mxu0 0.0
    %838 = vmatprep.subr.mxu0 0.0
    %839 = vmatpush2.msra.mxu0 0.0
    %840 = vmatprep.subr.mxu0 0.0
    %841 = vmatpush2.msra.mxu0 0.0
    %842 = vmatprep.subr.mxu0 0.0
    %843 = vmatpush2.msra.mxu0 0.0
    %844 = vmatprep.subr.mxu0 0.0
    %845 = vmatpush2.msra.mxu0 0.0
    %846 = vmatprep.mubr.f32.mxu0 0.0
    %847 = vmatmul.mubr.f32.gmra.mxu0 %v758
    %v848 = vpop.f32.mrf.mxu0
    %v849 = vadd.f32 %v780, %v848
    %v850 = vpop.f32.mrf.mxu0
    %851 = vdwg.mxu0
    %v852 = vmax.f32 %v849, 0.0
    %v853 = vld [vmem:[#allocation16] sm:$0xff]
    %v854 = vld [vmem:[#allocation16 + $0x8] sm:$0xff]
    %v855 = vld [vmem:[#allocation16 + $0x10] sm:$0xff]
    %v856 = vld [vmem:[#allocation16 + $0x18] sm:$0xff]
    %v857 = vld [vmem:[#allocation16 + $0x20] sm:$0xff]
    %v858 = vld [vmem:[#allocation16 + $0x28] sm:$0xff]
    %v859 = vld [vmem:[#allocation16 + $0x30] sm:$0xff]
    %v860 = vld [vmem:[#allocation16 + $0x38] sm:$0xff]
    %v861 = vld [vmem:[#allocation16 + $0x40] sm:$0xff]
    %v862 = vld [vmem:[#allocation16 + $0x48] sm:$0xff]
    %v863 = vld [vmem:[#allocation16 + $0x50] sm:$0xff]
    %v864 = vld [vmem:[#allocation16 + $0x58] sm:$0xff]
    %v865 = vld [vmem:[#allocation16 + $0x60] sm:$0xff]
    %v866 = vld [vmem:[#allocation16 + $0x68] sm:$0xff]
    %v867 = vld [vmem:[#allocation16 + $0x70] sm:$0xff]
    %v868 = vld [vmem:[#allocation16 + $0x78] sm:$0xff]
    %v869 = vld [vmem:[%s18] sm:$0x1]
    %v871 = vlaneseq
    %v872 = vshrl.u32 %v871, 7
    %v873 = vsub.s32 0, %v872
    %v874 = vrot.slane %v869, %v873
    %876 = vmatprep.subr.mxu0 0.0
    %877 = vmatpush1.msra.mxu0 %v868
    %878 = vmatprep.subr.mxu0 0.0
    %879 = vmatpush1.msra.mxu0 %v867
    %880 = vmatprep.subr.mxu0 0.0
    %881 = vmatpush1.msra.mxu0 %v866
    %882 = vmatprep.subr.mxu0 0.0
    %883 = vmatpush1.msra.mxu0 %v865
    %884 = vmatprep.subr.mxu0 0.0
    %885 = vmatpush1.msra.mxu0 %v864
    %886 = vmatprep.subr.mxu0 0.0
    %887 = vmatpush1.msra.mxu0 %v863
    %888 = vmatprep.subr.mxu0 0.0
    %889 = vmatpush1.msra.mxu0 %v862
    %890 = vmatprep.subr.mxu0 0.0
    %891 = vmatpush1.msra.mxu0 %v861
    %892 = vmatprep.subr.mxu0 0.0
    %893 = vmatpush1.msra.mxu0 %v860
    %894 = vmatprep.subr.mxu0 0.0
    %895 = vmatpush1.msra.mxu0 %v859
    %896 = vmatprep.subr.mxu0 0.0
    %897 = vmatpush1.msra.mxu0 %v858
    %898 = vmatprep.subr.mxu0 0.0
    %899 = vmatpush1.msra.mxu0 %v857
    %900 = vmatprep.subr.mxu0 0.0
    %901 = vmatpush1.msra.mxu0 %v856
    %902 = vmatprep.subr.mxu0 0.0
    %903 = vmatpush1.msra.mxu0 %v855
    %904 = vmatprep.subr.mxu0 0.0
    %905 = vmatpush1.msra.mxu0 %v854
    %906 = vmatprep.subr.mxu0 0.0
    %907 = vmatpush1.msra.mxu0 %v853
    %908 = vmatprep.subr.mxu0 0.0
    %909 = vmatpush2.msra.mxu0 0.0
    %910 = vmatprep.subr.mxu0 0.0
    %911 = vmatpush2.msra.mxu0 0.0
    %912 = vmatprep.subr.mxu0 0.0
    %913 = vmatpush2.msra.mxu0 0.0
    %914 = vmatprep.subr.mxu0 0.0
    %915 = vmatpush2.msra.mxu0 0.0
    %916 = vmatprep.subr.mxu0 0.0
    %917 = vmatpush2.msra.mxu0 0.0
    %918 = vmatprep.subr.mxu0 0.0
    %919 = vmatpush2.msra.mxu0 0.0
    %920 = vmatprep.subr.mxu0 0.0
    %921 = vmatpush2.msra.mxu0 0.0
    %922 = vmatprep.subr.mxu0 0.0
    %923 = vmatpush2.msra.mxu0 0.0
    %924 = vmatprep.subr.mxu0 0.0
    %925 = vmatpush2.msra.mxu0 0.0
    %926 = vmatprep.subr.mxu0 0.0
    %927 = vmatpush2.msra.mxu0 0.0
    %928 = vmatprep.subr.mxu0 0.0
    %929 = vmatpush2.msra.mxu0 0.0
    %930 = vmatprep.subr.mxu0 0.0
    %931 = vmatpush2.msra.mxu0 0.0
    %932 = vmatprep.subr.mxu0 0.0
    %933 = vmatpush2.msra.mxu0 0.0
    %934 = vmatprep.subr.mxu0 0.0
    %935 = vmatpush2.msra.mxu0 0.0
    %936 = vmatprep.subr.mxu0 0.0
    %937 = vmatpush2.msra.mxu0 0.0
    %938 = vmatprep.subr.mxu0 0.0
    %939 = vmatpush2.msra.mxu0 0.0
    %940 = vmatprep.mubr.f32.mxu0 0.0
    %941 = vmatmul.mubr.f32.gmra.mxu0 %v852
    %v942 = vpop.f32.mrf.mxu0
    %v943 = vadd.f32 %v874, %v942
    %v944 = vpop.f32.mrf.mxu0
    %945 = vdwg.mxu0
    %v946 = vsub.f32 0.0, %v568
    %v947 = vmul.f32 %v946, 1.442695
    %v948 = vpow.pop %v947
    %v949 = vsub.f32 %v186, %v943
    %v951 = vlaneseq
    %v952 = vshrl.u32 %v951, 7
    %v953 = vsub.s32 0, %v952
    %v954 = vrot.slane %v188, %v953
    %v956 = vmul.f32 %v954, %v949
    %v957 = vmul.f32 %v956, %v948
    %v958 = vadd.f32 %v195, %v957
    %959 = vst [vmem:[#allocation17] sm:$0xff] %v958
    %v960 = vsub.f32 0.0, %v188
    %v962 = vlaneseq
    %v963 = vshrl.u32 %v962, 7
    %v964 = vsub.s32 0, %v963
    %v965 = vrot.slane %v960, %v964
    %v967 = vmul.f32 %v965, %v568
    %968 = vst [vmem:[#allocation18] sm:$0xff] %v967
    // Predicated region
    $region114: #{tpu_custom_call.1} parent=1 // pred_check
      _
    $region115: #{tpu_custom_call.1} parent=1 // pred_check_branch
      %970 = sbr.rel (0) target = $region117
    $region116: #{tpu_custom_call.1} parent=1 // pred_region
      %s972 = ssub.s32 128, 128
      %973 = vsyncadd [#allocation4], %s972
      %s975 = sshll.u32 [#allocation17], 4
      %s976 = int_to_ptr.vmem [resolvable:$true] %s975
      %978 = dma.vmem_to_hbm [thread:$0]  %s976, 128, %s19, [#allocation4]
    $region117: #{tpu_custom_call.1} parent=1 // pred_fallthru
      _
    // Predicated region
    $region118: #{tpu_custom_call.1} parent=1 // pred_check
      _
    $region119: #{tpu_custom_call.1} parent=1 // pred_check_branch
      %980 = sbr.rel (0) target = $region121
    $region120: #{tpu_custom_call.1} parent=1 // pred_region
      %s982 = ssub.s32 128, 128
      %983 = vsyncadd [#allocation19], %s982
      %s985 = sshll.u32 [#allocation18], 4
      %s986 = int_to_ptr.vmem [resolvable:$true] %s985
      %988 = dma.vmem_to_hbm [thread:$0]  %s986, 128, %s20, [#allocation19]
    $region121: #{tpu_custom_call.1} parent=1 // pred_fallthru
      _
    // Predicated region
    $region122: #{tpu_custom_call.1} parent=1 // pred_check
      _
    $region123: #{tpu_custom_call.1} parent=1 // pred_check_branch
      %990 = sbr.rel (0) target = $region125
    $region124: #{tpu_custom_call.1} parent=1 // pred_region
      %991 = dma.done [#allocation4], 128
    $region125: #{tpu_custom_call.1} parent=1 // pred_fallthru
      _
    // Predicated region
    $region126: #{tpu_custom_call.1} parent=1 // pred_check
      _
    $region127: #{tpu_custom_call.1} parent=1 // pred_check_branch
      %993 = sbr.rel (0) target = $region129
    $region128: #{tpu_custom_call.1} parent=1 // pred_region
      %994 = dma.done [#allocation19], 128
    $region129: #{tpu_custom_call.1} parent=1 // pred_fallthru
      _
    %995 = vsyncpa [#allocation3], 1
    %996 = vsyncpa [#allocation6], 1
    %997 = vsyncpa [#allocation9], 1
    %998 = vsyncpa [#allocation12], 1
    %999 = vsyncpa [#allocation15], 1
    %1000 = vsyncpa [#allocation4], 1
    %1001 = vsyncpa [#allocation19], 1

</llo_original>
